<compile_context>
chip_gen: v5e
topology: v5e:2x2
jax: 0.10.0
libtpu: 0.0.40
codegen_flags: <defaults>
</compile_context>

<pallas_src>
import jax
import jax.numpy as jnp
from jax.experimental import pallas as pl
from jax.experimental.pallas import tpu as pltpu

NUM_CLASSES = 3
HIDDEN = 768
FC1 = 512
FC2 = 256
OUT_PAD = 128     # lane-dense padded width for the fc3 output
TM_MIN = 16       # bf16 minimum tile rows (sublane-packed)


def _round_up(x, m):
    return (x + m - 1) // m * m


def _default_tm():
    """256 for v6e/v7x (2x256^2 MXU), 128 for v5-generation (128-wide MXU)."""
    try:
        kind = jax.devices()[0].device_kind.lower()
    except Exception:
        return 256
    return 128 if "v5" in kind else 256


def phobert_ann_head_kernel(cls_ref, w1_ref, b1_ref, w2_ref, b2_ref,
                            w3_ref, b3_ref, out_ref):
    # cls_ref: (TM, HIDDEN) bf16 CLS activations for this batch tile.
    x = cls_ref[...]

    # fc1 + ReLU (768 -> 512); dropout1 is identity in eval mode.
    h = jnp.dot(x, w1_ref[...], preferred_element_type=jnp.float32)
    h = jnp.maximum(h + b1_ref[...], 0.0)

    # fc2 + ReLU (512 -> 256); dropout2 is identity in eval mode.
    h = jnp.dot(h.astype(jnp.bfloat16), w2_ref[...],
                preferred_element_type=jnp.float32)
    h = jnp.maximum(h + b2_ref[...], 0.0)

    # fc3 (256 -> OUT_PAD, zero-padded); valid logits live in lanes
    # [:NUM_CLASSES].  Full-lane (128-wide) store -> unmasked vst.
    h = jnp.dot(h.astype(jnp.bfloat16), w3_ref[...],
                preferred_element_type=jnp.float32)
    out_ref[...] = (h + b3_ref[...]).astype(out_ref.dtype)


def prepare_params(params):
    """One-time parameter prep: bf16 weight cast + lane-dense fc3 padding."""
    w1, b1, w2, b2, w3, b3 = params
    w3p = jnp.zeros((FC2, OUT_PAD), jnp.float32).at[:, :NUM_CLASSES].set(w3)
    b3p = jnp.zeros((1, OUT_PAD), jnp.float32).at[:, :NUM_CLASSES].set(
        b3.reshape(1, NUM_CLASSES))
    return (w1.astype(jnp.bfloat16), b1.astype(jnp.float32).reshape(1, FC1),
            w2.astype(jnp.bfloat16), b2.astype(jnp.float32).reshape(1, FC2),
            w3p.astype(jnp.bfloat16), b3p.astype(jnp.float32))


def phobert_ann_head(last_hidden_state, prepared_params, *, tm=None):
    """last_hidden_state: (B, S, 768) -> logits (B, NUM_CLASSES) float32."""
    B = last_hidden_state.shape[0]
    w1, b1, w2, b2, w3p, b3p = prepared_params

    if tm is None:
        tm = _default_tm()

    # Only the CLS row matters; cast activations to bf16 (f32 accumulation in
    # the kernel) so we never stream the full (B, S, 768) tensor into VMEM.
    cls_tok = last_hidden_state[:, 0, :].astype(jnp.bfloat16)

    # Batch tiling: shrink for tiny batches (bf16 needs >=16 rows), and split
    # single-tile batches in two so both v7x TensorCores get grid steps.
    tm = max(TM_MIN, min(tm, _round_up(max(B, 1), TM_MIN)))
    if _round_up(B, tm) // tm < 2 and B > TM_MIN:
        tm = max(TM_MIN, _round_up(pl.cdiv(B, 2), TM_MIN))
    b_pad = _round_up(B, tm)
    if b_pad != B:
        cls_tok = jnp.pad(cls_tok, ((0, b_pad - B), (0, 0)))
    grid = (b_pad // tm,)

    def const_map(i):
        return (0, 0)

    # Advisory cost so XLA schedules this small head sensibly.
    flops = 2 * b_pad * (HIDDEN * FC1 + FC1 * FC2 + FC2 * OUT_PAD)
    bytes_accessed = (
        b_pad * HIDDEN * 2 + b_pad * OUT_PAD * 4
        + (HIDDEN * FC1 + FC1 * FC2 + FC2 * OUT_PAD) * 2
        + (FC1 + FC2 + OUT_PAD) * 4)

    out = pl.pallas_call(
        phobert_ann_head_kernel,
        out_shape=jax.ShapeDtypeStruct((b_pad, OUT_PAD), jnp.float32),
        grid=grid,
        in_specs=[
            pl.BlockSpec((tm, HIDDEN), lambda i: (i, 0)),      # CLS tile (bf16)
            pl.BlockSpec((HIDDEN, FC1), const_map),            # w1 (bf16, resident)
            pl.BlockSpec((1, FC1), const_map),                 # b1 (f32)
            pl.BlockSpec((FC1, FC2), const_map),               # w2 (bf16)
            pl.BlockSpec((1, FC2), const_map),                 # b2 (f32)
            pl.BlockSpec((FC2, OUT_PAD), const_map),           # w3 (bf16, padded)
            pl.BlockSpec((1, OUT_PAD), const_map),             # b3 (f32, padded)
        ],
        out_specs=pl.BlockSpec((tm, OUT_PAD), lambda i: (i, 0)),
        compiler_params=pltpu.CompilerParams(
            dimension_semantics=("parallel",)),
        cost_estimate=pl.CostEstimate(
            flops=flops, transcendentals=0, bytes_accessed=bytes_accessed),
    )(cls_tok, w1, b1, w2, b2, w3p, b3p)

    return out[:B, :NUM_CLASSES]


def init_params(key):
    """Deterministic init matching nn.Linear shapes (stored as (in, out))."""
    ks = jax.random.split(key, 6)

    def linear(kw, kb, fan_in, fan_out):
        bound = 1.0 / (fan_in ** 0.5)
        w = jax.random.uniform(kw, (fan_in, fan_out), jnp.float32, -bound, bound)
        b = jax.random.uniform(kb, (1, fan_out), jnp.float32, -bound, bound)
        return w, b

    w1, b1 = linear(ks[0], ks[1], HIDDEN, FC1)
    w2, b2 = linear(ks[2], ks[3], FC1, FC2)
    w3, b3 = linear(ks[4], ks[5], FC2, NUM_CLASSES)
    return (w1, b1, w2, b2, w3, b3)


def reference_f32(last_hidden_state, params):
    """Plain f32 reference of the PyTorch head (dropout = identity)."""
    w1, b1, w2, b2, w3, b3 = params
    x = last_hidden_state[:, 0, :]
    x = jnp.maximum(x @ w1 + b1, 0.0)
    x = jnp.maximum(x @ w2 + b2, 0.0)
    return x @ w3 + b3


def reference_bf16(last_hidden_state, prepared_params):
    """Reference mirroring the kernel numerics (bf16 inputs, f32 accumulate)."""
    w1, b1, w2, b2, w3p, b3p = prepared_params
    x = last_hidden_state[:, 0, :].astype(jnp.bfloat16)
    h = jnp.dot(x, w1, preferred_element_type=jnp.float32)
    h = jnp.maximum(h + b1, 0.0)
    h = jnp.dot(h.astype(jnp.bfloat16), w2, preferred_element_type=jnp.float32)
    h = jnp.maximum(h + b2, 0.0)
    h = jnp.dot(h.astype(jnp.bfloat16), w3p, preferred_element_type=jnp.float32)
    return (h + b3p)[:, :NUM_CLASSES]


if __name__ == "__main__":
    key = jax.random.PRNGKey(0)
    k_h, k_p = jax.random.split(key)

    B, S = 2, 8  # small batch / sequence; hidden fixed at 768 by PhoBERT
    last_hidden_state = jax.random.normal(k_h, (B, S, HIDDEN), jnp.float32)
    params = init_params(k_p)
    prepared = prepare_params(params)

    logits = phobert_ann_head(last_hidden_state, prepared)
    logits = jax.block_until_ready(logits)

    assert logits.shape == (B, NUM_CLASSES)

    # Tight check against a reference with identical bf16/f32 numerics.
    ref_b = reference_bf16(last_hidden_state, prepared)
    assert jnp.allclose(logits, ref_b, atol=2e-2, rtol=2e-2), \
        "mismatch vs bf16 reference"

    # Loose sanity check against the plain f32 reference (bf16 quantization).
    ref_f = reference_f32(last_hidden_state, params)
    assert jnp.allclose(logits, ref_f, atol=0.25, rtol=0.25), \
        "mismatch vs f32 reference"

    print("KERNEL_OK")
</pallas_src>

<mosaic_0001>
module attributes {stable_mosaic.version = 11 : i64} {
  func.func @phobert_ann_head_kernel(%arg0: i32, %arg1: memref<16x768xbf16, #tpu.memory_space<vmem>>, %arg2: memref<768x512xbf16, #tpu.memory_space<vmem>>, %arg3: memref<1x512xf32, #tpu.memory_space<vmem>>, %arg4: memref<512x256xbf16, #tpu.memory_space<vmem>>, %arg5: memref<1x256xf32, #tpu.memory_space<vmem>>, %arg6: memref<256x128xbf16, #tpu.memory_space<vmem>>, %arg7: memref<1x128xf32, #tpu.memory_space<vmem>>, %arg8: memref<16x128xf32, #tpu.memory_space<vmem>>) attributes {dimension_semantics = [#tpu.dimension_semantics<parallel>], iteration_bounds = array<i64: 1>, scalar_prefetch = 0 : i64, scratch_operands = 0 : i64, tpu.core_type = #tpu.core_type<tc>, window_params = [{transform_indices = @transform_0, window_bounds = array<i64: 16, 768>}, {pipeline_mode = #tpu.pipeline_mode<synchronous>, transform_indices = @transform_1, window_bounds = array<i64: 768, 512>}, {pipeline_mode = #tpu.pipeline_mode<synchronous>, transform_indices = @transform_2, window_bounds = array<i64: 1, 512>}, {pipeline_mode = #tpu.pipeline_mode<synchronous>, transform_indices = @transform_3, window_bounds = array<i64: 512, 256>}, {pipeline_mode = #tpu.pipeline_mode<synchronous>, transform_indices = @transform_4, window_bounds = array<i64: 1, 256>}, {pipeline_mode = #tpu.pipeline_mode<synchronous>, transform_indices = @transform_5, window_bounds = array<i64: 256, 128>}, {pipeline_mode = #tpu.pipeline_mode<synchronous>, transform_indices = @transform_6, window_bounds = array<i64: 1, 128>}, {transform_indices = @transform_7, window_bounds = array<i64: 16, 128>}]} {
    %c0 = arith.constant 0 : index
    %c0_0 = arith.constant 0 : index
    %0 = vector.load %arg1[%c0, %c0_0] : memref<16x768xbf16, #tpu.memory_space<vmem>>, vector<16x768xbf16>
    %c0_1 = arith.constant 0 : index
    %c0_2 = arith.constant 0 : index
    %1 = vector.load %arg2[%c0_1, %c0_2] : memref<768x512xbf16, #tpu.memory_space<vmem>>, vector<768x512xbf16>
    %cst = arith.constant dense<0.000000e+00> : vector<16x512xf32>
    %2 = tpu.matmul %0, %1, %cst {dimension_numbers = #tpu.dot_dimension_numbers<[1], [0], [0], [1], [0, 0, 1, 1], [], []>} : vector<16x768xbf16>, vector<768x512xbf16>, vector<16x512xf32> -> vector<16x512xf32>
    %c0_3 = arith.constant 0 : index
    %c0_4 = arith.constant 0 : index
    %3 = vector.load %arg3[%c0_3, %c0_4] : memref<1x512xf32, #tpu.memory_space<vmem>>, vector<1x512xf32>
    %4 = vector.broadcast %3 : vector<1x512xf32> to vector<16x512xf32>
    %5 = arith.addf %2, %4 : vector<16x512xf32>
    %cst_5 = arith.constant 0.000000e+00 : f32
    %6 = vector.broadcast %cst_5 : f32 to vector<16x512xf32>
    %7 = arith.maximumf %5, %6 : vector<16x512xf32>
    %8 = arith.truncf %7 : vector<16x512xf32> to vector<16x512xbf16>
    %c0_6 = arith.constant 0 : index
    %c0_7 = arith.constant 0 : index
    %9 = vector.load %arg4[%c0_6, %c0_7] : memref<512x256xbf16, #tpu.memory_space<vmem>>, vector<512x256xbf16>
    %cst_8 = arith.constant dense<0.000000e+00> : vector<16x256xf32>
    %10 = tpu.matmul %8, %9, %cst_8 {dimension_numbers = #tpu.dot_dimension_numbers<[1], [0], [0], [1], [0, 0, 1, 1], [], []>} : vector<16x512xbf16>, vector<512x256xbf16>, vector<16x256xf32> -> vector<16x256xf32>
    %c0_9 = arith.constant 0 : index
    %c0_10 = arith.constant 0 : index
    %11 = vector.load %arg5[%c0_9, %c0_10] : memref<1x256xf32, #tpu.memory_space<vmem>>, vector<1x256xf32>
    %12 = vector.broadcast %11 : vector<1x256xf32> to vector<16x256xf32>
    %13 = arith.addf %10, %12 : vector<16x256xf32>
    %cst_11 = arith.constant 0.000000e+00 : f32
    %14 = vector.broadcast %cst_11 : f32 to vector<16x256xf32>
    %15 = arith.maximumf %13, %14 : vector<16x256xf32>
    %16 = arith.truncf %15 : vector<16x256xf32> to vector<16x256xbf16>
    %c0_12 = arith.constant 0 : index
    %c0_13 = arith.constant 0 : index
    %17 = vector.load %arg6[%c0_12, %c0_13] : memref<256x128xbf16, #tpu.memory_space<vmem>>, vector<256x128xbf16>
    %cst_14 = arith.constant dense<0.000000e+00> : vector<16x128xf32>
    %18 = tpu.matmul %16, %17, %cst_14 {dimension_numbers = #tpu.dot_dimension_numbers<[1], [0], [0], [1], [0, 0, 1, 1], [], []>} : vector<16x256xbf16>, vector<256x128xbf16>, vector<16x128xf32> -> vector<16x128xf32>
    %c0_15 = arith.constant 0 : index
    %c0_16 = arith.constant 0 : index
    %19 = vector.load %arg7[%c0_15, %c0_16] : memref<1x128xf32, #tpu.memory_space<vmem>>, vector<1x128xf32>
    %20 = vector.broadcast %19 : vector<1x128xf32> to vector<16x128xf32>
    %21 = arith.addf %18, %20 : vector<16x128xf32>
    %c0_17 = arith.constant 0 : index
    %c0_18 = arith.constant 0 : index
    %22 = vector.load %arg8[%c0_17, %c0_18] : memref<16x128xf32, #tpu.memory_space<vmem>>, vector<16x128xf32>
    tpu.vector_store %arg8[%c0_17, %c0_18], %21 {strides = array<i32>} : memref<16x128xf32, #tpu.memory_space<vmem>>, vector<16x128xf32>,
    return
  }
  func.func @transform_0(%arg0: i32) -> (i32, i32) {
    %c0_i32 = arith.constant 0 : i32
    %c0_i32_0 = arith.constant 0 : i32
    return %arg0, %c0_i32 : i32, i32
  }
  func.func @transform_1(%arg0: i32) -> (i32, i32) {
    %c0_i32 = arith.constant 0 : i32
    %c0_i32_0 = arith.constant 0 : i32
    %c0_i32_1 = arith.constant 0 : i32
    return %c0_i32, %c0_i32_0 : i32, i32
  }
  func.func @transform_2(%arg0: i32) -> (i32, i32) {
    %c0_i32 = arith.constant 0 : i32
    %c0_i32_0 = arith.constant 0 : i32
    %c0_i32_1 = arith.constant 0 : i32
    return %c0_i32, %c0_i32_0 : i32, i32
  }
  func.func @transform_3(%arg0: i32) -> (i32, i32) {
    %c0_i32 = arith.constant 0 : i32
    %c0_i32_0 = arith.constant 0 : i32
    %c0_i32_1 = arith.constant 0 : i32
    return %c0_i32, %c0_i32_0 : i32, i32
  }
  func.func @transform_4(%arg0: i32) -> (i32, i32) {
    %c0_i32 = arith.constant 0 : i32
    %c0_i32_0 = arith.constant 0 : i32
    %c0_i32_1 = arith.constant 0 : i32
    return %c0_i32, %c0_i32_0 : i32, i32
  }
  func.func @transform_5(%arg0: i32) -> (i32, i32) {
    %c0_i32 = arith.constant 0 : i32
    %c0_i32_0 = arith.constant 0 : i32
    %c0_i32_1 = arith.constant 0 : i32
    return %c0_i32, %c0_i32_0 : i32, i32
  }
  func.func @transform_6(%arg0: i32) -> (i32, i32) {
    %c0_i32 = arith.constant 0 : i32
    %c0_i32_0 = arith.constant 0 : i32
    %c0_i32_1 = arith.constant 0 : i32
    return %c0_i32, %c0_i32_0 : i32, i32
  }
  func.func @transform_7(%arg0: i32) -> (i32, i32) {
    %c0_i32 = arith.constant 0 : i32
    %c0_i32_0 = arith.constant 0 : i32
    return %arg0, %c0_i32 : i32, i32
  }
}

</mosaic_0001>

<llo_original>
// kernel: tpu_custom_call.1
$region0: #{tpu_custom_call.1}
  #allocation0 [shape = 'u32[]', space=smem, size = 0x4, offset = 0x4, fixed_abs, tag = 'smem constant byte address 0x4 - core index']
  #allocation1 [shape = 'u32[72,128]{1,0:T(1,128)}', space=vmem, size = 0x9000, scoped, tag = 'internal scratch']
  %s0 = inlined_call_operand.hbm [shape: bf16[16,768], index: 0, kind: input, shape index: {}]
  %s1 = inlined_call_operand.hbm [shape: bf16[768,512], index: 1, kind: input, shape index: {}]
  %s2 = inlined_call_operand.hbm [shape: f32[1,512], index: 2, kind: input, shape index: {}]
  %s3 = inlined_call_operand.hbm [shape: bf16[512,256], index: 3, kind: input, shape index: {}]
  %s4 = inlined_call_operand.vmem [shape: f32[1,256], index: 4, kind: input, shape index: {}]
  %s5 = inlined_call_operand.hbm [shape: bf16[256,128], index: 5, kind: input, shape index: {}]
  %s6 = inlined_call_operand.vmem [shape: f32[1,128], index: 6, kind: input, shape index: {}]
  %s7 = inlined_call_operand.hbm [shape: f32[16,128], index: 7, kind: output, shape index: {}]
  %s8 = sld [smem:[#allocation0]]
  $region58: #{tpu_custom_call.1} parent=0
    _
  %s10 = ssub.s32 1, %s8
  %s11 = scalar_select 0, %s10, %s8
  $region1: #{tpu_custom_call.1} parent=0
    #allocation2 [shape = 'u8[24576]{0}', space=vmem, size = 0x6000, scoped, tag = 'input window, operand 0, single buffered']
    #allocation3 [shape = 's32[1]{0}', space=sflag, size = 0x4, scoped, tag = 'scoped memory for tpu_custom_call.1']
    #allocation4 [shape = 's32[1]{0}', space=sflag, size = 0x4, scoped, tag = 'scoped memory for tpu_custom_call.1']
    #allocation5 [shape = 'u8[786432]{0}', space=vmem, size = 0xc0000, scoped, tag = 'input window, operand 1, single buffered']
    #allocation6 [shape = 's32[1]{0}', space=sflag, size = 0x4, scoped, tag = 'scoped memory for tpu_custom_call.1']
    #allocation7 [shape = 'u8[2048]{0}', space=vmem, size = 0x800, scoped, tag = 'input window, operand 2, single buffered']
    #allocation8 [shape = 'u8[262144]{0}', space=vmem, size = 0x40000, scoped, tag = 'input window, operand 3, single buffered']
    #allocation9 [shape = 's32[1]{0}', space=sflag, size = 0x4, scoped, tag = 'scoped memory for tpu_custom_call.1']
    #allocation10 [shape = 'u8[65536]{0}', space=vmem, size = 0x10000, scoped, tag = 'input window, operand 5, single buffered']
    #allocation11 [shape = 'u8[8192]{0}', space=vmem, size = 0x2000, scoped, tag = 'output window, operand 0, single buffered']
    %12 = vsyncpa [#allocation3], 0
    %13 = vsyncpa [#allocation6], 0
    %14 = vsyncpa [#allocation9], 0
    %15 = vsyncpa [#allocation4], 0
    // Predicated region
    $region2: #{tpu_custom_call.1} parent=1 // pred_check
      _
    $region3: #{tpu_custom_call.1} parent=1 // pred_check_branch
      %17 = sbr.rel (0) target = $region5
    $region4: #{tpu_custom_call.1} parent=1 // pred_region
      %19 = vsyncadd [#allocation3], 0
      %s20 = sshll.u32 %s0, 4
      %s21 = int_to_ptr.hbm [resolvable:$true] %s20
      %s22 = sshll.u32 [#allocation2], 4
      %s23 = int_to_ptr.vmem [resolvable:$true] %s22
      %28 = dma.hbm_to_vmem [thread:$0]  %s21, 768, %s23, [#allocation3], 384, 384, 24
    $region5: #{tpu_custom_call.1} parent=1 // pred_fallthru
      _
    // Predicated region
    $region6: #{tpu_custom_call.1} parent=1 // pred_check
      _
    $region7: #{tpu_custom_call.1} parent=1 // pred_check_branch
      %30 = sbr.rel (0) target = $region9
    $region8: #{tpu_custom_call.1} parent=1 // pred_region
      %32 = vsyncadd [#allocation6], 0
      %s33 = sshll.u32 %s1, 4
      %s34 = int_to_ptr.hbm [resolvable:$true] %s33
      %s35 = sshll.u32 [#allocation5], 4
      %s36 = int_to_ptr.vmem [resolvable:$true] %s35
      %41 = dma.hbm_to_vmem [thread:$0]  %s34, 24576, %s36, [#allocation6], 256, 256, 16
    $region9: #{tpu_custom_call.1} parent=1 // pred_fallthru
      _
    // Predicated region
    $region10: #{tpu_custom_call.1} parent=1 // pred_check
      _
    $region11: #{tpu_custom_call.1} parent=1 // pred_check_branch
      %43 = sbr.rel (0) target = $region13
    $region12: #{tpu_custom_call.1} parent=1 // pred_region
      %45 = vsyncadd [#allocation6], 0
      %s47 = sshll.u32 %s2, 4
      %s48 = int_to_ptr.hbm [resolvable:$true] %s47
      %s49 = sshll.u32 [#allocation7], 4
      %s50 = int_to_ptr.vmem [resolvable:$true] %s49
      %52 = dma.hbm_to_vmem [thread:$0]  %s48, 64, %s50, [#allocation6]
    $region13: #{tpu_custom_call.1} parent=1 // pred_fallthru
      _
    // Predicated region
    $region14: #{tpu_custom_call.1} parent=1 // pred_check
      _
    $region15: #{tpu_custom_call.1} parent=1 // pred_check_branch
      %54 = sbr.rel (0) target = $region17
    $region16: #{tpu_custom_call.1} parent=1 // pred_region
      %56 = vsyncadd [#allocation9], 0
      %s57 = sshll.u32 %s3, 4
      %s58 = int_to_ptr.hbm [resolvable:$true] %s57
      %s59 = sshll.u32 [#allocation8], 4
      %s60 = int_to_ptr.vmem [resolvable:$true] %s59
      %65 = dma.hbm_to_vmem [thread:$0]  %s58, 8192, %s60, [#allocation9], 128, 128, 8
    $region17: #{tpu_custom_call.1} parent=1 // pred_fallthru
      _
    // Predicated region
    $region18: #{tpu_custom_call.1} parent=1 // pred_check
      _
    $region19: #{tpu_custom_call.1} parent=1 // pred_check_branch
      %67 = sbr.rel (0) target = $region21
    $region20: #{tpu_custom_call.1} parent=1 // pred_region
      _
    $region21: #{tpu_custom_call.1} parent=1 // pred_fallthru
      _
    // Predicated region
    $region22: #{tpu_custom_call.1} parent=1 // pred_check
      _
    $region23: #{tpu_custom_call.1} parent=1 // pred_check_branch
      %69 = sbr.rel (0) target = $region25
    $region24: #{tpu_custom_call.1} parent=1 // pred_region
      %71 = vsyncadd [#allocation9], 0
      %s72 = sshll.u32 %s5, 4
      %s73 = int_to_ptr.hbm [resolvable:$true] %s72
      %s74 = sshll.u32 [#allocation10], 4
      %s75 = int_to_ptr.vmem [resolvable:$true] %s74
      %80 = dma.hbm_to_vmem [thread:$0]  %s73, 2048, %s75, [#allocation9], 64, 64, 4
    $region25: #{tpu_custom_call.1} parent=1 // pred_fallthru
      _
    // Predicated region
    $region26: #{tpu_custom_call.1} parent=1 // pred_check
      _
    $region27: #{tpu_custom_call.1} parent=1 // pred_check_branch
      %82 = sbr.rel (0) target = $region29
    $region28: #{tpu_custom_call.1} parent=1 // pred_region
      _
    $region29: #{tpu_custom_call.1} parent=1 // pred_fallthru
      _
    // Predicated region
    $region30: #{tpu_custom_call.1} parent=1 // pred_check
      _
    $region31: #{tpu_custom_call.1} parent=1 // pred_check_branch
      %84 = sbr.rel (0) target = $region33
    $region32: #{tpu_custom_call.1} parent=1 // pred_region
      %86 = dma.done [#allocation3], 768
    $region33: #{tpu_custom_call.1} parent=1 // pred_fallthru
      _
    // Predicated region
    $region34: #{tpu_custom_call.1} parent=1 // pred_check
      _
    $region35: #{tpu_custom_call.1} parent=1 // pred_check_branch
      %88 = sbr.rel (0) target = $region37
    $region36: #{tpu_custom_call.1} parent=1 // pred_region
      %90 = dma.done [#allocation6], 24576
    $region37: #{tpu_custom_call.1} parent=1 // pred_fallthru
      _
    // Predicated region
    $region38: #{tpu_custom_call.1} parent=1 // pred_check
      _
    $region39: #{tpu_custom_call.1} parent=1 // pred_check_branch
      %92 = sbr.rel (0) target = $region41
    $region40: #{tpu_custom_call.1} parent=1 // pred_region
      %94 = dma.done [#allocation6], 64
    $region41: #{tpu_custom_call.1} parent=1 // pred_fallthru
      _
    // Predicated region
    $region42: #{tpu_custom_call.1} parent=1 // pred_check
      _
    $region43: #{tpu_custom_call.1} parent=1 // pred_check_branch
      %96 = sbr.rel (0) target = $region45
    $region44: #{tpu_custom_call.1} parent=1 // pred_region
      %98 = dma.done [#allocation9], 8192
    $region45: #{tpu_custom_call.1} parent=1 // pred_fallthru
      _
    // Predicated region
    $region46: #{tpu_custom_call.1} parent=1 // pred_check
      _
    $region47: #{tpu_custom_call.1} parent=1 // pred_check_branch
      %100 = sbr.rel (0) target = $region49
    $region48: #{tpu_custom_call.1} parent=1 // pred_region
      %102 = dma.done [#allocation9], 2048
    $region49: #{tpu_custom_call.1} parent=1 // pred_fallthru
      _
    %v103 = vld [vmem:[#allocation2] sm:$0xff]
    %v104 = vld [vmem:[#allocation2 + $0x8] sm:$0xff]
    %v105 = vld [vmem:[#allocation2 + $0x10] sm:$0xff]
    %v106 = vld [vmem:[#allocation2 + $0x18] sm:$0xff]
    %v107 = vld [vmem:[#allocation2 + $0x20] sm:$0xff]
    %v108 = vld [vmem:[#allocation2 + $0x28] sm:$0xff]
    %v109 = vld [vmem:[#allocation5] sm:$0xff]
    %v110 = vld [vmem:[#allocation5 + $0x8] sm:$0xff]
    %v111 = vld [vmem:[#allocation5 + $0x10] sm:$0xff]
    %v112 = vld [vmem:[#allocation5 + $0x18] sm:$0xff]
    %v113 = vld [vmem:[#allocation5 + $0x20] sm:$0xff]
    %v114 = vld [vmem:[#allocation5 + $0x28] sm:$0xff]
    %v115 = vld [vmem:[#allocation5 + $0x30] sm:$0xff]
    %v116 = vld [vmem:[#allocation5 + $0x38] sm:$0xff]
    %v117 = vld [vmem:[#allocation5 + $0x40] sm:$0xff]
    %v118 = vld [vmem:[#allocation5 + $0x48] sm:$0xff]
    %v119 = vld [vmem:[#allocation5 + $0x50] sm:$0xff]
    %v120 = vld [vmem:[#allocation5 + $0x58] sm:$0xff]
    %v121 = vld [vmem:[#allocation5 + $0x60] sm:$0xff]
    %v122 = vld [vmem:[#allocation5 + $0x68] sm:$0xff]
    %v123 = vld [vmem:[#allocation5 + $0x70] sm:$0xff]
    %v124 = vld [vmem:[#allocation5 + $0x78] sm:$0xff]
    %v125 = vld [vmem:[#allocation5 + $0x80] sm:$0xff]
    %v126 = vld [vmem:[#allocation5 + $0x88] sm:$0xff]
    %v127 = vld [vmem:[#allocation5 + $0x90] sm:$0xff]
    %v128 = vld [vmem:[#allocation5 + $0x98] sm:$0xff]
    %v129 = vld [vmem:[#allocation5 + $0xa0] sm:$0xff]
    %v130 = vld [vmem:[#allocation5 + $0xa8] sm:$0xff]
    %v131 = vld [vmem:[#allocation5 + $0xb0] sm:$0xff]
    %v132 = vld [vmem:[#allocation5 + $0xb8] sm:$0xff]
    %v133 = vld [vmem:[#allocation5 + $0xc0] sm:$0xff]
    %v134 = vld [vmem:[#allocation5 + $0xc8] sm:$0xff]
    %v135 = vld [vmem:[#allocation5 + $0xd0] sm:$0xff]
    %v136 = vld [vmem:[#allocation5 + $0xd8] sm:$0xff]
    %v137 = vld [vmem:[#allocation5 + $0xe0] sm:$0xff]
    %v138 = vld [vmem:[#allocation5 + $0xe8] sm:$0xff]
    %v139 = vld [vmem:[#allocation5 + $0xf0] sm:$0xff]
    %v140 = vld [vmem:[#allocation5 + $0xf8] sm:$0xff]
    %v141 = vld [vmem:[#allocation5 + $0x100] sm:$0xff]
    %v142 = vld [vmem:[#allocation5 + $0x108] sm:$0xff]
    %v143 = vld [vmem:[#allocation5 + $0x110] sm:$0xff]
    %v144 = vld [vmem:[#allocation5 + $0x118] sm:$0xff]
    %v145 = vld [vmem:[#allocation5 + $0x120] sm:$0xff]
    %v146 = vld [vmem:[#allocation5 + $0x128] sm:$0xff]
    %v147 = vld [vmem:[#allocation5 + $0x130] sm:$0xff]
    %v148 = vld [vmem:[#allocation5 + $0x138] sm:$0xff]
    %v149 = vld [vmem:[#allocation5 + $0x140] sm:$0xff]
    %v150 = vld [vmem:[#allocation5 + $0x148] sm:$0xff]
    %v151 = vld [vmem:[#allocation5 + $0x150] sm:$0xff]
    %v152 = vld [vmem:[#allocation5 + $0x158] sm:$0xff]
    %v153 = vld [vmem:[#allocation5 + $0x160] sm:$0xff]
    %v154 = vld [vmem:[#allocation5 + $0x168] sm:$0xff]
    %v155 = vld [vmem:[#allocation5 + $0x170] sm:$0xff]
    %v156 = vld [vmem:[#allocation5 + $0x178] sm:$0xff]
    %v157 = vld [vmem:[#allocation5 + $0x180] sm:$0xff]
    %v158 = vld [vmem:[#allocation5 + $0x188] sm:$0xff]
    %v159 = vld [vmem:[#allocation5 + $0x190] sm:$0xff]
    %v160 = vld [vmem:[#allocation5 + $0x198] sm:$0xff]
    %v161 = vld [vmem:[#allocation5 + $0x1a0] sm:$0xff]
    %v162 = vld [vmem:[#allocation5 + $0x1a8] sm:$0xff]
    %v163 = vld [vmem:[#allocation5 + $0x1b0] sm:$0xff]
    %v164 = vld [vmem:[#allocation5 + $0x1b8] sm:$0xff]
    %v165 = vld [vmem:[#allocation5 + $0x1c0] sm:$0xff]
    %v166 = vld [vmem:[#allocation5 + $0x1c8] sm:$0xff]
    %v167 = vld [vmem:[#allocation5 + $0x1d0] sm:$0xff]
    %v168 = vld [vmem:[#allocation5 + $0x1d8] sm:$0xff]
    %v169 = vld [vmem:[#allocation5 + $0x1e0] sm:$0xff]
    %v170 = vld [vmem:[#allocation5 + $0x1e8] sm:$0xff]
    %v171 = vld [vmem:[#allocation5 + $0x1f0] sm:$0xff]
    %v172 = vld [vmem:[#allocation5 + $0x1f8] sm:$0xff]
    %v173 = vld [vmem:[#allocation5 + $0x200] sm:$0xff]
    %v174 = vld [vmem:[#allocation5 + $0x208] sm:$0xff]
    %v175 = vld [vmem:[#allocation5 + $0x210] sm:$0xff]
    %v176 = vld [vmem:[#allocation5 + $0x218] sm:$0xff]
    %v177 = vld [vmem:[#allocation5 + $0x220] sm:$0xff]
    %v178 = vld [vmem:[#allocation5 + $0x228] sm:$0xff]
    %v179 = vld [vmem:[#allocation5 + $0x230] sm:$0xff]
    %v180 = vld [vmem:[#allocation5 + $0x238] sm:$0xff]
    %v181 = vld [vmem:[#allocation5 + $0x240] sm:$0xff]
    %v182 = vld [vmem:[#allocation5 + $0x248] sm:$0xff]
    %v183 = vld [vmem:[#allocation5 + $0x250] sm:$0xff]
    %v184 = vld [vmem:[#allocation5 + $0x258] sm:$0xff]
    %v185 = vld [vmem:[#allocation5 + $0x260] sm:$0xff]
    %v186 = vld [vmem:[#allocation5 + $0x268] sm:$0xff]
    %v187 = vld [vmem:[#allocation5 + $0x270] sm:$0xff]
    %v188 = vld [vmem:[#allocation5 + $0x278] sm:$0xff]
    %v189 = vld [vmem:[#allocation5 + $0x280] sm:$0xff]
    %v190 = vld [vmem:[#allocation5 + $0x288] sm:$0xff]
    %v191 = vld [vmem:[#allocation5 + $0x290] sm:$0xff]
    %v192 = vld [vmem:[#allocation5 + $0x298] sm:$0xff]
    %v193 = vld [vmem:[#allocation5 + $0x2a0] sm:$0xff]
    %v194 = vld [vmem:[#allocation5 + $0x2a8] sm:$0xff]
    %v195 = vld [vmem:[#allocation5 + $0x2b0] sm:$0xff]
    %v196 = vld [vmem:[#allocation5 + $0x2b8] sm:$0xff]
    %v197 = vld [vmem:[#allocation5 + $0x2c0] sm:$0xff]
    %v198 = vld [vmem:[#allocation5 + $0x2c8] sm:$0xff]
    %v199 = vld [vmem:[#allocation5 + $0x2d0] sm:$0xff]
    %v200 = vld [vmem:[#allocation5 + $0x2d8] sm:$0xff]
    %v201 = vld [vmem:[#allocation5 + $0x2e0] sm:$0xff]
    %v202 = vld [vmem:[#allocation5 + $0x2e8] sm:$0xff]
    %v203 = vld [vmem:[#allocation5 + $0x2f0] sm:$0xff]
    %v204 = vld [vmem:[#allocation5 + $0x2f8] sm:$0xff]
    %v205 = vld [vmem:[#allocation5 + $0x300] sm:$0xff]
    %v206 = vld [vmem:[#allocation5 + $0x308] sm:$0xff]
    %v207 = vld [vmem:[#allocation5 + $0x310] sm:$0xff]
    %v208 = vld [vmem:[#allocation5 + $0x318] sm:$0xff]
    %v209 = vld [vmem:[#allocation5 + $0x320] sm:$0xff]
    %v210 = vld [vmem:[#allocation5 + $0x328] sm:$0xff]
    %v211 = vld [vmem:[#allocation5 + $0x330] sm:$0xff]
    %v212 = vld [vmem:[#allocation5 + $0x338] sm:$0xff]
    %v213 = vld [vmem:[#allocation5 + $0x340] sm:$0xff]
    %v214 = vld [vmem:[#allocation5 + $0x348] sm:$0xff]
    %v215 = vld [vmem:[#allocation5 + $0x350] sm:$0xff]
    %v216 = vld [vmem:[#allocation5 + $0x358] sm:$0xff]
    %v217 = vld [vmem:[#allocation5 + $0x360] sm:$0xff]
    %v218 = vld [vmem:[#allocation5 + $0x368] sm:$0xff]
    %v219 = vld [vmem:[#allocation5 + $0x370] sm:$0xff]
    %v220 = vld [vmem:[#allocation5 + $0x378] sm:$0xff]
    %v221 = vld [vmem:[#allocation5 + $0x380] sm:$0xff]
    %v222 = vld [vmem:[#allocation5 + $0x388] sm:$0xff]
    %v223 = vld [vmem:[#allocation5 + $0x390] sm:$0xff]
    %v224 = vld [vmem:[#allocation5 + $0x398] sm:$0xff]
    %v225 = vld [vmem:[#allocation5 + $0x3a0] sm:$0xff]
    %v226 = vld [vmem:[#allocation5 + $0x3a8] sm:$0xff]
    %v227 = vld [vmem:[#allocation5 + $0x3b0] sm:$0xff]
    %v228 = vld [vmem:[#allocation5 + $0x3b8] sm:$0xff]
    %v229 = vld [vmem:[#allocation5 + $0x3c0] sm:$0xff]
    %v230 = vld [vmem:[#allocation5 + $0x3c8] sm:$0xff]
    %v231 = vld [vmem:[#allocation5 + $0x3d0] sm:$0xff]
    %v232 = vld [vmem:[#allocation5 + $0x3d8] sm:$0xff]
    %v233 = vld [vmem:[#allocation5 + $0x3e0] sm:$0xff]
    %v234 = vld [vmem:[#allocation5 + $0x3e8] sm:$0xff]
    %v235 = vld [vmem:[#allocation5 + $0x3f0] sm:$0xff]
    %v236 = vld [vmem:[#allocation5 + $0x3f8] sm:$0xff]
    %v237 = vld [vmem:[#allocation5 + $0x400] sm:$0xff]
    %v238 = vld [vmem:[#allocation5 + $0x408] sm:$0xff]
    %v239 = vld [vmem:[#allocation5 + $0x410] sm:$0xff]
    %v240 = vld [vmem:[#allocation5 + $0x418] sm:$0xff]
    %v241 = vld [vmem:[#allocation5 + $0x420] sm:$0xff]
    %v242 = vld [vmem:[#allocation5 + $0x428] sm:$0xff]
    %v243 = vld [vmem:[#allocation5 + $0x430] sm:$0xff]
    %v244 = vld [vmem:[#allocation5 + $0x438] sm:$0xff]
    %v245 = vld [vmem:[#allocation5 + $0x440] sm:$0xff]
    %v246 = vld [vmem:[#allocation5 + $0x448] sm:$0xff]
    %v247 = vld [vmem:[#allocation5 + $0x450] sm:$0xff]
    %v248 = vld [vmem:[#allocation5 + $0x458] sm:$0xff]
    %v249 = vld [vmem:[#allocation5 + $0x460] sm:$0xff]
    %v250 = vld [vmem:[#allocation5 + $0x468] sm:$0xff]
    %v251 = vld [vmem:[#allocation5 + $0x470] sm:$0xff]
    %v252 = vld [vmem:[#allocation5 + $0x478] sm:$0xff]
    %v253 = vld [vmem:[#allocation5 + $0x480] sm:$0xff]
    %v254 = vld [vmem:[#allocation5 + $0x488] sm:$0xff]
    %v255 = vld [vmem:[#allocation5 + $0x490] sm:$0xff]
    %v256 = vld [vmem:[#allocation5 + $0x498] sm:$0xff]
    %v257 = vld [vmem:[#allocation5 + $0x4a0] sm:$0xff]
    %v258 = vld [vmem:[#allocation5 + $0x4a8] sm:$0xff]
    %v259 = vld [vmem:[#allocation5 + $0x4b0] sm:$0xff]
    %v260 = vld [vmem:[#allocation5 + $0x4b8] sm:$0xff]
    %v261 = vld [vmem:[#allocation5 + $0x4c0] sm:$0xff]
    %v262 = vld [vmem:[#allocation5 + $0x4c8] sm:$0xff]
    %v263 = vld [vmem:[#allocation5 + $0x4d0] sm:$0xff]
    %v264 = vld [vmem:[#allocation5 + $0x4d8] sm:$0xff]
    %v265 = vld [vmem:[#allocation5 + $0x4e0] sm:$0xff]
    %v266 = vld [vmem:[#allocation5 + $0x4e8] sm:$0xff]
    %v267 = vld [vmem:[#allocation5 + $0x4f0] sm:$0xff]
    %v268 = vld [vmem:[#allocation5 + $0x4f8] sm:$0xff]
    %v269 = vld [vmem:[#allocation5 + $0x500] sm:$0xff]
    %v270 = vld [vmem:[#allocation5 + $0x508] sm:$0xff]
    %v271 = vld [vmem:[#allocation5 + $0x510] sm:$0xff]
    %v272 = vld [vmem:[#allocation5 + $0x518] sm:$0xff]
    %v273 = vld [vmem:[#allocation5 + $0x520] sm:$0xff]
    %v274 = vld [vmem:[#allocation5 + $0x528] sm:$0xff]
    %v275 = vld [vmem:[#allocation5 + $0x530] sm:$0xff]
    %v276 = vld [vmem:[#allocation5 + $0x538] sm:$0xff]
    %v277 = vld [vmem:[#allocation5 + $0x540] sm:$0xff]
    %v278 = vld [vmem:[#allocation5 + $0x548] sm:$0xff]
    %v279 = vld [vmem:[#allocation5 + $0x550] sm:$0xff]
    %v280 = vld [vmem:[#allocation5 + $0x558] sm:$0xff]
    %v281 = vld [vmem:[#allocation5 + $0x560] sm:$0xff]
    %v282 = vld [vmem:[#allocation5 + $0x568] sm:$0xff]
    %v283 = vld [vmem:[#allocation5 + $0x570] sm:$0xff]
    %v284 = vld [vmem:[#allocation5 + $0x578] sm:$0xff]
    %v285 = vld [vmem:[#allocation5 + $0x580] sm:$0xff]
    %v286 = vld [vmem:[#allocation5 + $0x588] sm:$0xff]
    %v287 = vld [vmem:[#allocation5 + $0x590] sm:$0xff]
    %v288 = vld [vmem:[#allocation5 + $0x598] sm:$0xff]
    %v289 = vld [vmem:[#allocation5 + $0x5a0] sm:$0xff]
    %v290 = vld [vmem:[#allocation5 + $0x5a8] sm:$0xff]
    %v291 = vld [vmem:[#allocation5 + $0x5b0] sm:$0xff]
    %v292 = vld [vmem:[#allocation5 + $0x5b8] sm:$0xff]
    %v293 = vld [vmem:[#allocation5 + $0x5c0] sm:$0xff]
    %v294 = vld [vmem:[#allocation5 + $0x5c8] sm:$0xff]
    %v295 = vld [vmem:[#allocation5 + $0x5d0] sm:$0xff]
    %v296 = vld [vmem:[#allocation5 + $0x5d8] sm:$0xff]
    %v297 = vld [vmem:[#allocation5 + $0x5e0] sm:$0xff]
    %v298 = vld [vmem:[#allocation5 + $0x5e8] sm:$0xff]
    %v299 = vld [vmem:[#allocation5 + $0x5f0] sm:$0xff]
    %v300 = vld [vmem:[#allocation5 + $0x5f8] sm:$0xff]
    %v301 = vld [vmem:[#allocation7] sm:$0xf]
    %v303 = vperm.slane %v301, 0
    %v304 = vperm.slane %v301, 1
    %v305 = vperm.slane %v301, 2
    %v306 = vperm.slane %v301, 3
    %v317 = vunpack.c.l.b16 %v103
    %v318 = vunpack.c.h.b16 %v103
    %v319 = vunpack.c.l.b16 %v104
    %v320 = vunpack.c.h.b16 %v104
    %v321 = vunpack.c.l.b16 %v105
    %v322 = vunpack.c.h.b16 %v105
    %v323 = vunpack.c.l.b16 %v106
    %v324 = vunpack.c.h.b16 %v106
    %v325 = vunpack.c.l.b16 %v107
    %v326 = vunpack.c.h.b16 %v107
    %v327 = vunpack.c.l.b16 %v108
    %v328 = vunpack.c.h.b16 %v108
    %v329 = vpack.c.b16 %v323, %v317
    %v330 = vpack.c.b16 %v324, %v318
    %v331 = vpack.c.b16 %v325, %v319
    %v332 = vpack.c.b16 %v326, %v320
    %v333 = vpack.c.b16 %v327, %v321
    %v334 = vpack.c.b16 %v328, %v322
    %v533 = vunpack.c.l.b16 %v109
    %v534 = vunpack.c.h.b16 %v109
    %v535 = vunpack.c.l.b16 %v110
    %v536 = vunpack.c.h.b16 %v110
    %v537 = vunpack.c.l.b16 %v111
    %v538 = vunpack.c.h.b16 %v111
    %v539 = vunpack.c.l.b16 %v112
    %v540 = vunpack.c.h.b16 %v112
    %v541 = vunpack.c.l.b16 %v113
    %v542 = vunpack.c.h.b16 %v113
    %v543 = vunpack.c.l.b16 %v114
    %v544 = vunpack.c.h.b16 %v114
    %v545 = vunpack.c.l.b16 %v115
    %v546 = vunpack.c.h.b16 %v115
    %v547 = vunpack.c.l.b16 %v116
    %v548 = vunpack.c.h.b16 %v116
    %v549 = vunpack.c.l.b16 %v117
    %v550 = vunpack.c.h.b16 %v117
    %v551 = vunpack.c.l.b16 %v118
    %v552 = vunpack.c.h.b16 %v118
    %v553 = vunpack.c.l.b16 %v119
    %v554 = vunpack.c.h.b16 %v119
    %v555 = vunpack.c.l.b16 %v120
    %v556 = vunpack.c.h.b16 %v120
    %v557 = vunpack.c.l.b16 %v121
    %v558 = vunpack.c.h.b16 %v121
    %v559 = vunpack.c.l.b16 %v122
    %v560 = vunpack.c.h.b16 %v122
    %v561 = vunpack.c.l.b16 %v123
    %v562 = vunpack.c.h.b16 %v123
    %v563 = vunpack.c.l.b16 %v124
    %v564 = vunpack.c.h.b16 %v124
    %v565 = vunpack.c.l.b16 %v125
    %v566 = vunpack.c.h.b16 %v125
    %v567 = vunpack.c.l.b16 %v126
    %v568 = vunpack.c.h.b16 %v126
    %v569 = vunpack.c.l.b16 %v127
    %v570 = vunpack.c.h.b16 %v127
    %v571 = vunpack.c.l.b16 %v128
    %v572 = vunpack.c.h.b16 %v128
    %v573 = vunpack.c.l.b16 %v129
    %v574 = vunpack.c.h.b16 %v129
    %v575 = vunpack.c.l.b16 %v130
    %v576 = vunpack.c.h.b16 %v130
    %v577 = vunpack.c.l.b16 %v131
    %v578 = vunpack.c.h.b16 %v131
    %v579 = vunpack.c.l.b16 %v132
    %v580 = vunpack.c.h.b16 %v132
    %v581 = vunpack.c.l.b16 %v133
    %v582 = vunpack.c.h.b16 %v133
    %v583 = vunpack.c.l.b16 %v134
    %v584 = vunpack.c.h.b16 %v134
    %v585 = vunpack.c.l.b16 %v135
    %v586 = vunpack.c.h.b16 %v135
    %v587 = vunpack.c.l.b16 %v136
    %v588 = vunpack.c.h.b16 %v136
    %v589 = vunpack.c.l.b16 %v137
    %v590 = vunpack.c.h.b16 %v137
    %v591 = vunpack.c.l.b16 %v138
    %v592 = vunpack.c.h.b16 %v138
    %v593 = vunpack.c.l.b16 %v139
    %v594 = vunpack.c.h.b16 %v139
    %v595 = vunpack.c.l.b16 %v140
    %v596 = vunpack.c.h.b16 %v140
    %v597 = vunpack.c.l.b16 %v141
    %v598 = vunpack.c.h.b16 %v141
    %v599 = vunpack.c.l.b16 %v142
    %v600 = vunpack.c.h.b16 %v142
    %v601 = vunpack.c.l.b16 %v143
    %v602 = vunpack.c.h.b16 %v143
    %v603 = vunpack.c.l.b16 %v144
    %v604 = vunpack.c.h.b16 %v144
    %v605 = vunpack.c.l.b16 %v145
    %v606 = vunpack.c.h.b16 %v145
    %v607 = vunpack.c.l.b16 %v146
    %v608 = vunpack.c.h.b16 %v146
    %v609 = vunpack.c.l.b16 %v147
    %v610 = vunpack.c.h.b16 %v147
    %v611 = vunpack.c.l.b16 %v148
    %v612 = vunpack.c.h.b16 %v148
    %v613 = vunpack.c.l.b16 %v149
    %v614 = vunpack.c.h.b16 %v149
    %v615 = vunpack.c.l.b16 %v150
    %v616 = vunpack.c.h.b16 %v150
    %v617 = vunpack.c.l.b16 %v151
    %v618 = vunpack.c.h.b16 %v151
    %v619 = vunpack.c.l.b16 %v152
    %v620 = vunpack.c.h.b16 %v152
    %v621 = vunpack.c.l.b16 %v153
    %v622 = vunpack.c.h.b16 %v153
    %v623 = vunpack.c.l.b16 %v154
    %v624 = vunpack.c.h.b16 %v154
    %v625 = vunpack.c.l.b16 %v155
    %v626 = vunpack.c.h.b16 %v155
    %v627 = vunpack.c.l.b16 %v156
    %v628 = vunpack.c.h.b16 %v156
    %v629 = vunpack.c.l.b16 %v157
    %v630 = vunpack.c.h.b16 %v157
    %v631 = vunpack.c.l.b16 %v158
    %v632 = vunpack.c.h.b16 %v158
    %v633 = vunpack.c.l.b16 %v159
    %v634 = vunpack.c.h.b16 %v159
    %v635 = vunpack.c.l.b16 %v160
    %v636 = vunpack.c.h.b16 %v160
    %v637 = vunpack.c.l.b16 %v161
    %v638 = vunpack.c.h.b16 %v161
    %v639 = vunpack.c.l.b16 %v162
    %v640 = vunpack.c.h.b16 %v162
    %v641 = vunpack.c.l.b16 %v163
    %v642 = vunpack.c.h.b16 %v163
    %v643 = vunpack.c.l.b16 %v164
    %v644 = vunpack.c.h.b16 %v164
    %v645 = vunpack.c.l.b16 %v165
    %v646 = vunpack.c.h.b16 %v165
    %v647 = vunpack.c.l.b16 %v166
    %v648 = vunpack.c.h.b16 %v166
    %v649 = vunpack.c.l.b16 %v167
    %v650 = vunpack.c.h.b16 %v167
    %v651 = vunpack.c.l.b16 %v168
    %v652 = vunpack.c.h.b16 %v168
    %v653 = vunpack.c.l.b16 %v169
    %v654 = vunpack.c.h.b16 %v169
    %v655 = vunpack.c.l.b16 %v170
    %v656 = vunpack.c.h.b16 %v170
    %v657 = vunpack.c.l.b16 %v171
    %v658 = vunpack.c.h.b16 %v171
    %v659 = vunpack.c.l.b16 %v172
    %v660 = vunpack.c.h.b16 %v172
    %v661 = vunpack.c.l.b16 %v173
    %v662 = vunpack.c.h.b16 %v173
    %v663 = vunpack.c.l.b16 %v174
    %v664 = vunpack.c.h.b16 %v174
    %v665 = vunpack.c.l.b16 %v175
    %v666 = vunpack.c.h.b16 %v175
    %v667 = vunpack.c.l.b16 %v176
    %v668 = vunpack.c.h.b16 %v176
    %v669 = vunpack.c.l.b16 %v177
    %v670 = vunpack.c.h.b16 %v177
    %v671 = vunpack.c.l.b16 %v178
    %v672 = vunpack.c.h.b16 %v178
    %v673 = vunpack.c.l.b16 %v179
    %v674 = vunpack.c.h.b16 %v179
    %v675 = vunpack.c.l.b16 %v180
    %v676 = vunpack.c.h.b16 %v180
    %v677 = vunpack.c.l.b16 %v181
    %v678 = vunpack.c.h.b16 %v181
    %v679 = vunpack.c.l.b16 %v182
    %v680 = vunpack.c.h.b16 %v182
    %v681 = vunpack.c.l.b16 %v183
    %v682 = vunpack.c.h.b16 %v183
    %v683 = vunpack.c.l.b16 %v184
    %v684 = vunpack.c.h.b16 %v184
    %v685 = vunpack.c.l.b16 %v185
    %v686 = vunpack.c.h.b16 %v185
    %v687 = vunpack.c.l.b16 %v186
    %v688 = vunpack.c.h.b16 %v186
    %v689 = vunpack.c.l.b16 %v187
    %v690 = vunpack.c.h.b16 %v187
    %v691 = vunpack.c.l.b16 %v188
    %v692 = vunpack.c.h.b16 %v188
    %v693 = vunpack.c.l.b16 %v189
    %v694 = vunpack.c.h.b16 %v189
    %v695 = vunpack.c.l.b16 %v190
    %v696 = vunpack.c.h.b16 %v190
    %v697 = vunpack.c.l.b16 %v191
    %v698 = vunpack.c.h.b16 %v191
    %v699 = vunpack.c.l.b16 %v192
    %v700 = vunpack.c.h.b16 %v192
    %v701 = vunpack.c.l.b16 %v193
    %v702 = vunpack.c.h.b16 %v193
    %v703 = vunpack.c.l.b16 %v194
    %v704 = vunpack.c.h.b16 %v194
    %v705 = vunpack.c.l.b16 %v195
    %v706 = vunpack.c.h.b16 %v195
    %v707 = vunpack.c.l.b16 %v196
    %v708 = vunpack.c.h.b16 %v196
    %v709 = vunpack.c.l.b16 %v197
    %v710 = vunpack.c.h.b16 %v197
    %v711 = vunpack.c.l.b16 %v198
    %v712 = vunpack.c.h.b16 %v198
    %v713 = vunpack.c.l.b16 %v199
    %v714 = vunpack.c.h.b16 %v199
    %v715 = vunpack.c.l.b16 %v200
    %v716 = vunpack.c.h.b16 %v200
    %v717 = vunpack.c.l.b16 %v201
    %v718 = vunpack.c.h.b16 %v201
    %v719 = vunpack.c.l.b16 %v202
    %v720 = vunpack.c.h.b16 %v202
    %v721 = vunpack.c.l.b16 %v203
    %v722 = vunpack.c.h.b16 %v203
    %v723 = vunpack.c.l.b16 %v204
    %v724 = vunpack.c.h.b16 %v204
    %v725 = vunpack.c.l.b16 %v205
    %v726 = vunpack.c.h.b16 %v205
    %v727 = vunpack.c.l.b16 %v206
    %v728 = vunpack.c.h.b16 %v206
    %v729 = vunpack.c.l.b16 %v207
    %v730 = vunpack.c.h.b16 %v207
    %v731 = vunpack.c.l.b16 %v208
    %v732 = vunpack.c.h.b16 %v208
    %v733 = vunpack.c.l.b16 %v209
    %v734 = vunpack.c.h.b16 %v209
    %v735 = vunpack.c.l.b16 %v210
    %v736 = vunpack.c.h.b16 %v210
    %v737 = vunpack.c.l.b16 %v211
    %v738 = vunpack.c.h.b16 %v211
    %v739 = vunpack.c.l.b16 %v212
    %v740 = vunpack.c.h.b16 %v212
    %v741 = vunpack.c.l.b16 %v213
    %v742 = vunpack.c.h.b16 %v213
    %v743 = vunpack.c.l.b16 %v214
    %v744 = vunpack.c.h.b16 %v214
    %v745 = vunpack.c.l.b16 %v215
    %v746 = vunpack.c.h.b16 %v215
    %v747 = vunpack.c.l.b16 %v216
    %v748 = vunpack.c.h.b16 %v216
    %v749 = vunpack.c.l.b16 %v217
    %v750 = vunpack.c.h.b16 %v217
    %v751 = vunpack.c.l.b16 %v218
    %v752 = vunpack.c.h.b16 %v218
    %v753 = vunpack.c.l.b16 %v219
    %v754 = vunpack.c.h.b16 %v219
    %v755 = vunpack.c.l.b16 %v220
    %v756 = vunpack.c.h.b16 %v220
    %v757 = vunpack.c.l.b16 %v221
    %v758 = vunpack.c.h.b16 %v221
    %v759 = vunpack.c.l.b16 %v222
    %v760 = vunpack.c.h.b16 %v222
    %v761 = vunpack.c.l.b16 %v223
    %v762 = vunpack.c.h.b16 %v223
    %v763 = vunpack.c.l.b16 %v224
    %v764 = vunpack.c.h.b16 %v224
    %v765 = vunpack.c.l.b16 %v225
    %v766 = vunpack.c.h.b16 %v225
    %v767 = vunpack.c.l.b16 %v226
    %v768 = vunpack.c.h.b16 %v226
    %v769 = vunpack.c.l.b16 %v227
    %v770 = vunpack.c.h.b16 %v227
    %v771 = vunpack.c.l.b16 %v228
    %v772 = vunpack.c.h.b16 %v228
    %v773 = vunpack.c.l.b16 %v229
    %v774 = vunpack.c.h.b16 %v229
    %v775 = vunpack.c.l.b16 %v230
    %v776 = vunpack.c.h.b16 %v230
    %v777 = vunpack.c.l.b16 %v231
    %v778 = vunpack.c.h.b16 %v231
    %v779 = vunpack.c.l.b16 %v232
    %v780 = vunpack.c.h.b16 %v232
    %v781 = vunpack.c.l.b16 %v233
    %v782 = vunpack.c.h.b16 %v233
    %v783 = vunpack.c.l.b16 %v234
    %v784 = vunpack.c.h.b16 %v234
    %v785 = vunpack.c.l.b16 %v235
    %v786 = vunpack.c.h.b16 %v235
    %v787 = vunpack.c.l.b16 %v236
    %v788 = vunpack.c.h.b16 %v236
    %v789 = vunpack.c.l.b16 %v237
    %v790 = vunpack.c.h.b16 %v237
    %v791 = vunpack.c.l.b16 %v238
    %v792 = vunpack.c.h.b16 %v238
    %v793 = vunpack.c.l.b16 %v239
    %v794 = vunpack.c.h.b16 %v239
    %v795 = vunpack.c.l.b16 %v240
    %v796 = vunpack.c.h.b16 %v240
    %v797 = vunpack.c.l.b16 %v241
    %v798 = vunpack.c.h.b16 %v241
    %v799 = vunpack.c.l.b16 %v242
    %v800 = vunpack.c.h.b16 %v242
    %v801 = vunpack.c.l.b16 %v243
    %v802 = vunpack.c.h.b16 %v243
    %v803 = vunpack.c.l.b16 %v244
    %v804 = vunpack.c.h.b16 %v244
    %v805 = vunpack.c.l.b16 %v245
    %v806 = vunpack.c.h.b16 %v245
    %v807 = vunpack.c.l.b16 %v246
    %v808 = vunpack.c.h.b16 %v246
    %v809 = vunpack.c.l.b16 %v247
    %v810 = vunpack.c.h.b16 %v247
    %v811 = vunpack.c.l.b16 %v248
    %v812 = vunpack.c.h.b16 %v248
    %v813 = vunpack.c.l.b16 %v249
    %v814 = vunpack.c.h.b16 %v249
    %v815 = vunpack.c.l.b16 %v250
    %v816 = vunpack.c.h.b16 %v250
    %v817 = vunpack.c.l.b16 %v251
    %v818 = vunpack.c.h.b16 %v251
    %v819 = vunpack.c.l.b16 %v252
    %v820 = vunpack.c.h.b16 %v252
    %v821 = vunpack.c.l.b16 %v253
    %v822 = vunpack.c.h.b16 %v253
    %v823 = vunpack.c.l.b16 %v254
    %v824 = vunpack.c.h.b16 %v254
    %v825 = vunpack.c.l.b16 %v255
    %v826 = vunpack.c.h.b16 %v255
    %v827 = vunpack.c.l.b16 %v256
    %v828 = vunpack.c.h.b16 %v256
    %v829 = vunpack.c.l.b16 %v257
    %v830 = vunpack.c.h.b16 %v257
    %v831 = vunpack.c.l.b16 %v258
    %v832 = vunpack.c.h.b16 %v258
    %v833 = vunpack.c.l.b16 %v259
    %v834 = vunpack.c.h.b16 %v259
    %v835 = vunpack.c.l.b16 %v260
    %v836 = vunpack.c.h.b16 %v260
    %v837 = vunpack.c.l.b16 %v261
    %v838 = vunpack.c.h.b16 %v261
    %v839 = vunpack.c.l.b16 %v262
    %v840 = vunpack.c.h.b16 %v262
    %v841 = vunpack.c.l.b16 %v263
    %v842 = vunpack.c.h.b16 %v263
    %v843 = vunpack.c.l.b16 %v264
    %v844 = vunpack.c.h.b16 %v264
    %v845 = vunpack.c.l.b16 %v265
    %v846 = vunpack.c.h.b16 %v265
    %v847 = vunpack.c.l.b16 %v266
    %v848 = vunpack.c.h.b16 %v266
    %v849 = vunpack.c.l.b16 %v267
    %v850 = vunpack.c.h.b16 %v267
    %v851 = vunpack.c.l.b16 %v268
    %v852 = vunpack.c.h.b16 %v268
    %v853 = vunpack.c.l.b16 %v269
    %v854 = vunpack.c.h.b16 %v269
    %v855 = vunpack.c.l.b16 %v270
    %v856 = vunpack.c.h.b16 %v270
    %v857 = vunpack.c.l.b16 %v271
    %v858 = vunpack.c.h.b16 %v271
    %v859 = vunpack.c.l.b16 %v272
    %v860 = vunpack.c.h.b16 %v272
    %v861 = vunpack.c.l.b16 %v273
    %v862 = vunpack.c.h.b16 %v273
    %v863 = vunpack.c.l.b16 %v274
    %v864 = vunpack.c.h.b16 %v274
    %v865 = vunpack.c.l.b16 %v275
    %v866 = vunpack.c.h.b16 %v275
    %v867 = vunpack.c.l.b16 %v276
    %v868 = vunpack.c.h.b16 %v276
    %v869 = vunpack.c.l.b16 %v277
    %v870 = vunpack.c.h.b16 %v277
    %v871 = vunpack.c.l.b16 %v278
    %v872 = vunpack.c.h.b16 %v278
    %v873 = vunpack.c.l.b16 %v279
    %v874 = vunpack.c.h.b16 %v279
    %v875 = vunpack.c.l.b16 %v280
    %v876 = vunpack.c.h.b16 %v280
    %v877 = vunpack.c.l.b16 %v281
    %v878 = vunpack.c.h.b16 %v281
    %v879 = vunpack.c.l.b16 %v282
    %v880 = vunpack.c.h.b16 %v282
    %v881 = vunpack.c.l.b16 %v283
    %v882 = vunpack.c.h.b16 %v283
    %v883 = vunpack.c.l.b16 %v284
    %v884 = vunpack.c.h.b16 %v284
    %v885 = vunpack.c.l.b16 %v285
    %v886 = vunpack.c.h.b16 %v285
    %v887 = vunpack.c.l.b16 %v286
    %v888 = vunpack.c.h.b16 %v286
    %v889 = vunpack.c.l.b16 %v287
    %v890 = vunpack.c.h.b16 %v287
    %v891 = vunpack.c.l.b16 %v288
    %v892 = vunpack.c.h.b16 %v288
    %v893 = vunpack.c.l.b16 %v289
    %v894 = vunpack.c.h.b16 %v289
    %v895 = vunpack.c.l.b16 %v290
    %v896 = vunpack.c.h.b16 %v290
    %v897 = vunpack.c.l.b16 %v291
    %v898 = vunpack.c.h.b16 %v291
    %v899 = vunpack.c.l.b16 %v292
    %v900 = vunpack.c.h.b16 %v292
    %v901 = vunpack.c.l.b16 %v293
    %v902 = vunpack.c.h.b16 %v293
    %v903 = vunpack.c.l.b16 %v294
    %v904 = vunpack.c.h.b16 %v294
    %v905 = vunpack.c.l.b16 %v295
    %v906 = vunpack.c.h.b16 %v295
    %v907 = vunpack.c.l.b16 %v296
    %v908 = vunpack.c.h.b16 %v296
    %v909 = vunpack.c.l.b16 %v297
    %v910 = vunpack.c.h.b16 %v297
    %v911 = vunpack.c.l.b16 %v298
    %v912 = vunpack.c.h.b16 %v298
    %v913 = vunpack.c.l.b16 %v299
    %v914 = vunpack.c.h.b16 %v299
    %v915 = vunpack.c.l.b16 %v300
    %v916 = vunpack.c.h.b16 %v300
    %v917 = vpack.c.b16 %v537, %v533
    %v918 = vpack.c.b16 %v538, %v534
    %v919 = vpack.c.b16 %v539, %v535
    %v920 = vpack.c.b16 %v540, %v536
    %v921 = vpack.c.b16 %v545, %v541
    %v922 = vpack.c.b16 %v546, %v542
    %v923 = vpack.c.b16 %v547, %v543
    %v924 = vpack.c.b16 %v548, %v544
    %v925 = vpack.c.b16 %v553, %v549
    %v926 = vpack.c.b16 %v554, %v550
    %v927 = vpack.c.b16 %v555, %v551
    %v928 = vpack.c.b16 %v556, %v552
    %v929 = vpack.c.b16 %v561, %v557
    %v930 = vpack.c.b16 %v562, %v558
    %v931 = vpack.c.b16 %v563, %v559
    %v932 = vpack.c.b16 %v564, %v560
    %v933 = vpack.c.b16 %v569, %v565
    %v934 = vpack.c.b16 %v570, %v566
    %v935 = vpack.c.b16 %v571, %v567
    %v936 = vpack.c.b16 %v572, %v568
    %v937 = vpack.c.b16 %v577, %v573
    %v938 = vpack.c.b16 %v578, %v574
    %v939 = vpack.c.b16 %v579, %v575
    %v940 = vpack.c.b16 %v580, %v576
    %v941 = vpack.c.b16 %v585, %v581
    %v942 = vpack.c.b16 %v586, %v582
    %v943 = vpack.c.b16 %v587, %v583
    %v944 = vpack.c.b16 %v588, %v584
    %v945 = vpack.c.b16 %v593, %v589
    %v946 = vpack.c.b16 %v594, %v590
    %v947 = vpack.c.b16 %v595, %v591
    %v948 = vpack.c.b16 %v596, %v592
    %v949 = vpack.c.b16 %v601, %v597
    %v950 = vpack.c.b16 %v602, %v598
    %v951 = vpack.c.b16 %v603, %v599
    %v952 = vpack.c.b16 %v604, %v600
    %v953 = vpack.c.b16 %v609, %v605
    %v954 = vpack.c.b16 %v610, %v606
    %v955 = vpack.c.b16 %v611, %v607
    %v956 = vpack.c.b16 %v612, %v608
    %v957 = vpack.c.b16 %v617, %v613
    %v958 = vpack.c.b16 %v618, %v614
    %v959 = vpack.c.b16 %v619, %v615
    %v960 = vpack.c.b16 %v620, %v616
    %v961 = vpack.c.b16 %v625, %v621
    %v962 = vpack.c.b16 %v626, %v622
    %v963 = vpack.c.b16 %v627, %v623
    %v964 = vpack.c.b16 %v628, %v624
    %v965 = vpack.c.b16 %v633, %v629
    %v966 = vpack.c.b16 %v634, %v630
    %v967 = vpack.c.b16 %v635, %v631
    %v968 = vpack.c.b16 %v636, %v632
    %v969 = vpack.c.b16 %v641, %v637
    %v970 = vpack.c.b16 %v642, %v638
    %v971 = vpack.c.b16 %v643, %v639
    %v972 = vpack.c.b16 %v644, %v640
    %v973 = vpack.c.b16 %v649, %v645
    %v974 = vpack.c.b16 %v650, %v646
    %v975 = vpack.c.b16 %v651, %v647
    %v976 = vpack.c.b16 %v652, %v648
    %v977 = vpack.c.b16 %v657, %v653
    %v978 = vpack.c.b16 %v658, %v654
    %v979 = vpack.c.b16 %v659, %v655
    %v980 = vpack.c.b16 %v660, %v656
    %v981 = vpack.c.b16 %v665, %v661
    %v982 = vpack.c.b16 %v666, %v662
    %v983 = vpack.c.b16 %v667, %v663
    %v984 = vpack.c.b16 %v668, %v664
    %v985 = vpack.c.b16 %v673, %v669
    %v986 = vpack.c.b16 %v674, %v670
    %v987 = vpack.c.b16 %v675, %v671
    %v988 = vpack.c.b16 %v676, %v672
    %v989 = vpack.c.b16 %v681, %v677
    %v990 = vpack.c.b16 %v682, %v678
    %v991 = vpack.c.b16 %v683, %v679
    %v992 = vpack.c.b16 %v684, %v680
    %v993 = vpack.c.b16 %v689, %v685
    %v994 = vpack.c.b16 %v690, %v686
    %v995 = vpack.c.b16 %v691, %v687
    %v996 = vpack.c.b16 %v692, %v688
    %v997 = vpack.c.b16 %v697, %v693
    %v998 = vpack.c.b16 %v698, %v694
    %v999 = vpack.c.b16 %v699, %v695
    %v1000 = vpack.c.b16 %v700, %v696
    %v1001 = vpack.c.b16 %v705, %v701
    %v1002 = vpack.c.b16 %v706, %v702
    %v1003 = vpack.c.b16 %v707, %v703
    %v1004 = vpack.c.b16 %v708, %v704
    %v1005 = vpack.c.b16 %v713, %v709
    %v1006 = vpack.c.b16 %v714, %v710
    %v1007 = vpack.c.b16 %v715, %v711
    %v1008 = vpack.c.b16 %v716, %v712
    %v1009 = vpack.c.b16 %v721, %v717
    %v1010 = vpack.c.b16 %v722, %v718
    %v1011 = vpack.c.b16 %v723, %v719
    %v1012 = vpack.c.b16 %v724, %v720
    %v1013 = vpack.c.b16 %v729, %v725
    %v1014 = vpack.c.b16 %v730, %v726
    %v1015 = vpack.c.b16 %v731, %v727
    %v1016 = vpack.c.b16 %v732, %v728
    %v1017 = vpack.c.b16 %v737, %v733
    %v1018 = vpack.c.b16 %v738, %v734
    %v1019 = vpack.c.b16 %v739, %v735
    %v1020 = vpack.c.b16 %v740, %v736
    %v1021 = vpack.c.b16 %v745, %v741
    %v1022 = vpack.c.b16 %v746, %v742
    %v1023 = vpack.c.b16 %v747, %v743
    %v1024 = vpack.c.b16 %v748, %v744
    %v1025 = vpack.c.b16 %v753, %v749
    %v1026 = vpack.c.b16 %v754, %v750
    %v1027 = vpack.c.b16 %v755, %v751
    %v1028 = vpack.c.b16 %v756, %v752
    %v1029 = vpack.c.b16 %v761, %v757
    %v1030 = vpack.c.b16 %v762, %v758
    %v1031 = vpack.c.b16 %v763, %v759
    %v1032 = vpack.c.b16 %v764, %v760
    %v1033 = vpack.c.b16 %v769, %v765
    %v1034 = vpack.c.b16 %v770, %v766
    %v1035 = vpack.c.b16 %v771, %v767
    %v1036 = vpack.c.b16 %v772, %v768
    %v1037 = vpack.c.b16 %v777, %v773
    %v1038 = vpack.c.b16 %v778, %v774
    %v1039 = vpack.c.b16 %v779, %v775
    %v1040 = vpack.c.b16 %v780, %v776
    %v1041 = vpack.c.b16 %v785, %v781
    %v1042 = vpack.c.b16 %v786, %v782
    %v1043 = vpack.c.b16 %v787, %v783
    %v1044 = vpack.c.b16 %v788, %v784
    %v1045 = vpack.c.b16 %v793, %v789
    %v1046 = vpack.c.b16 %v794, %v790
    %v1047 = vpack.c.b16 %v795, %v791
    %v1048 = vpack.c.b16 %v796, %v792
    %v1049 = vpack.c.b16 %v801, %v797
    %v1050 = vpack.c.b16 %v802, %v798
    %v1051 = vpack.c.b16 %v803, %v799
    %v1052 = vpack.c.b16 %v804, %v800
    %v1053 = vpack.c.b16 %v809, %v805
    %v1054 = vpack.c.b16 %v810, %v806
    %v1055 = vpack.c.b16 %v811, %v807
    %v1056 = vpack.c.b16 %v812, %v808
    %v1057 = vpack.c.b16 %v817, %v813
    %v1058 = vpack.c.b16 %v818, %v814
    %v1059 = vpack.c.b16 %v819, %v815
    %v1060 = vpack.c.b16 %v820, %v816
    %v1061 = vpack.c.b16 %v825, %v821
    %v1062 = vpack.c.b16 %v826, %v822
    %v1063 = vpack.c.b16 %v827, %v823
    %v1064 = vpack.c.b16 %v828, %v824
    %v1065 = vpack.c.b16 %v833, %v829
    %v1066 = vpack.c.b16 %v834, %v830
    %v1067 = vpack.c.b16 %v835, %v831
    %v1068 = vpack.c.b16 %v836, %v832
    %v1069 = vpack.c.b16 %v841, %v837
    %v1070 = vpack.c.b16 %v842, %v838
    %v1071 = vpack.c.b16 %v843, %v839
    %v1072 = vpack.c.b16 %v844, %v840
    %v1073 = vpack.c.b16 %v849, %v845
    %v1074 = vpack.c.b16 %v850, %v846
    %v1075 = vpack.c.b16 %v851, %v847
    %v1076 = vpack.c.b16 %v852, %v848
    %v1077 = vpack.c.b16 %v857, %v853
    %v1078 = vpack.c.b16 %v858, %v854
    %v1079 = vpack.c.b16 %v859, %v855
    %v1080 = vpack.c.b16 %v860, %v856
    %v1081 = vpack.c.b16 %v865, %v861
    %v1082 = vpack.c.b16 %v866, %v862
    %v1083 = vpack.c.b16 %v867, %v863
    %v1084 = vpack.c.b16 %v868, %v864
    %v1085 = vpack.c.b16 %v873, %v869
    %v1086 = vpack.c.b16 %v874, %v870
    %v1087 = vpack.c.b16 %v875, %v871
    %v1088 = vpack.c.b16 %v876, %v872
    %v1089 = vpack.c.b16 %v881, %v877
    %v1090 = vpack.c.b16 %v882, %v878
    %v1091 = vpack.c.b16 %v883, %v879
    %v1092 = vpack.c.b16 %v884, %v880
    %v1093 = vpack.c.b16 %v889, %v885
    %v1094 = vpack.c.b16 %v890, %v886
    %v1095 = vpack.c.b16 %v891, %v887
    %v1096 = vpack.c.b16 %v892, %v888
    %v1097 = vpack.c.b16 %v897, %v893
    %v1098 = vpack.c.b16 %v898, %v894
    %v1099 = vpack.c.b16 %v899, %v895
    %v1100 = vpack.c.b16 %v900, %v896
    %v1101 = vpack.c.b16 %v905, %v901
    %v1102 = vpack.c.b16 %v906, %v902
    %v1103 = vpack.c.b16 %v907, %v903
    %v1104 = vpack.c.b16 %v908, %v904
    %v1105 = vpack.c.b16 %v913, %v909
    %v1106 = vpack.c.b16 %v914, %v910
    %v1107 = vpack.c.b16 %v915, %v911
    %v1108 = vpack.c.b16 %v916, %v912
    %1301 = vmatpush.bf16.msra.mxu0 %v945
    %1302 = vmatpush.bf16.msra.mxu0 %v941
    %1303 = vmatpush.bf16.msra.mxu0 %v937
    %1304 = vmatpush.bf16.msra.mxu0 %v933
    %1305 = vmatpush.bf16.msra.mxu0 %v929
    %1306 = vmatpush.bf16.msra.mxu0 %v925
    %1307 = vmatpush.bf16.msra.mxu0 %v921
    %1308 = vmatpush.bf16.msra.mxu0 %v917
    %1309 = vmatmul.bf16.gmra.mxu0 %v329
    %v1310 = vpop.f32.mrf.mxu0
    %v1311 = vadd.f32 %v303, %v1310
    %v1312 = vpop.f32.mrf.mxu0
    %v1313 = vadd.f32 %v303, %v1312
    %1314 = vdwg.mxu0
    %1315 = vmatpush.bf16.msra.mxu0 %v977
    %1316 = vmatpush.bf16.msra.mxu0 %v973
    %1317 = vmatpush.bf16.msra.mxu0 %v969
    %1318 = vmatpush.bf16.msra.mxu0 %v965
    %1319 = vmatpush.bf16.msra.mxu0 %v961
    %1320 = vmatpush.bf16.msra.mxu0 %v957
    %1321 = vmatpush.bf16.msra.mxu0 %v953
    %1322 = vmatpush.bf16.msra.mxu0 %v949
    %1323 = vmatmul.bf16.gmra.mxu0 %v330
    %v1324 = vpop.f32.mrf.mxu0
    %v1325 = vadd.f32 %v1311, %v1324
    %v1326 = vpop.f32.mrf.mxu0
    %v1327 = vadd.f32 %v1313, %v1326
    %1328 = vdwg.mxu0
    %1329 = vmatpush.bf16.msra.mxu0 %v1009
    %1330 = vmatpush.bf16.msra.mxu0 %v1005
    %1331 = vmatpush.bf16.msra.mxu0 %v1001
    %1332 = vmatpush.bf16.msra.mxu0 %v997
    %1333 = vmatpush.bf16.msra.mxu0 %v993
    %1334 = vmatpush.bf16.msra.mxu0 %v989
    %1335 = vmatpush.bf16.msra.mxu0 %v985
    %1336 = vmatpush.bf16.msra.mxu0 %v981
    %1337 = vmatmul.bf16.gmra.mxu0 %v331
    %v1338 = vpop.f32.mrf.mxu0
    %v1339 = vadd.f32 %v1325, %v1338
    %v1340 = vpop.f32.mrf.mxu0
    %v1341 = vadd.f32 %v1327, %v1340
    %1342 = vdwg.mxu0
    %1343 = vmatpush.bf16.msra.mxu0 %v1041
    %1344 = vmatpush.bf16.msra.mxu0 %v1037
    %1345 = vmatpush.bf16.msra.mxu0 %v1033
    %1346 = vmatpush.bf16.msra.mxu0 %v1029
    %1347 = vmatpush.bf16.msra.mxu0 %v1025
    %1348 = vmatpush.bf16.msra.mxu0 %v1021
    %1349 = vmatpush.bf16.msra.mxu0 %v1017
    %1350 = vmatpush.bf16.msra.mxu0 %v1013
    %1351 = vmatmul.bf16.gmra.mxu0 %v332
    %v1352 = vpop.f32.mrf.mxu0
    %v1353 = vadd.f32 %v1339, %v1352
    %v1354 = vpop.f32.mrf.mxu0
    %v1355 = vadd.f32 %v1341, %v1354
    %1356 = vdwg.mxu0
    %1357 = vmatpush.bf16.msra.mxu0 %v1073
    %1358 = vmatpush.bf16.msra.mxu0 %v1069
    %1359 = vmatpush.bf16.msra.mxu0 %v1065
    %1360 = vmatpush.bf16.msra.mxu0 %v1061
    %1361 = vmatpush.bf16.msra.mxu0 %v1057
    %1362 = vmatpush.bf16.msra.mxu0 %v1053
    %1363 = vmatpush.bf16.msra.mxu0 %v1049
    %1364 = vmatpush.bf16.msra.mxu0 %v1045
    %1365 = vmatmul.bf16.gmra.mxu0 %v333
    %v1366 = vpop.f32.mrf.mxu0
    %v1367 = vadd.f32 %v1353, %v1366
    %v1368 = vpop.f32.mrf.mxu0
    %v1369 = vadd.f32 %v1355, %v1368
    %1370 = vdwg.mxu0
    %1371 = vmatpush.bf16.msra.mxu0 %v1105
    %1372 = vmatpush.bf16.msra.mxu0 %v1101
    %1373 = vmatpush.bf16.msra.mxu0 %v1097
    %1374 = vmatpush.bf16.msra.mxu0 %v1093
    %1375 = vmatpush.bf16.msra.mxu0 %v1089
    %1376 = vmatpush.bf16.msra.mxu0 %v1085
    %1377 = vmatpush.bf16.msra.mxu0 %v1081
    %1378 = vmatpush.bf16.msra.mxu0 %v1077
    %1379 = vmatmul.bf16.gmra.mxu0 %v334
    %v1380 = vpop.f32.mrf.mxu0
    %v1381 = vadd.f32 %v1367, %v1380
    %v1382 = vpop.f32.mrf.mxu0
    %v1383 = vadd.f32 %v1369, %v1382
    %1384 = vdwg.mxu0
    %1385 = vmatpush.bf16.msra.mxu0 %v946
    %1386 = vmatpush.bf16.msra.mxu0 %v942
    %1387 = vmatpush.bf16.msra.mxu0 %v938
    %1388 = vmatpush.bf16.msra.mxu0 %v934
    %1389 = vmatpush.bf16.msra.mxu0 %v930
    %1390 = vmatpush.bf16.msra.mxu0 %v926
    %1391 = vmatpush.bf16.msra.mxu0 %v922
    %1392 = vmatpush.bf16.msra.mxu0 %v918
    %1393 = vmatmul.bf16.gmra.mxu0 %v329
    %v1394 = vpop.f32.mrf.mxu0
    %v1395 = vadd.f32 %v304, %v1394
    %v1396 = vpop.f32.mrf.mxu0
    %v1397 = vadd.f32 %v304, %v1396
    %1398 = vdwg.mxu0
    %1399 = vmatpush.bf16.msra.mxu0 %v978
    %1400 = vmatpush.bf16.msra.mxu0 %v974
    %1401 = vmatpush.bf16.msra.mxu0 %v970
    %1402 = vmatpush.bf16.msra.mxu0 %v966
    %1403 = vmatpush.bf16.msra.mxu0 %v962
    %1404 = vmatpush.bf16.msra.mxu0 %v958
    %1405 = vmatpush.bf16.msra.mxu0 %v954
    %1406 = vmatpush.bf16.msra.mxu0 %v950
    %1407 = vmatmul.bf16.gmra.mxu0 %v330
    %v1408 = vpop.f32.mrf.mxu0
    %v1409 = vadd.f32 %v1395, %v1408
    %v1410 = vpop.f32.mrf.mxu0
    %v1411 = vadd.f32 %v1397, %v1410
    %1412 = vdwg.mxu0
    %1413 = vmatpush.bf16.msra.mxu0 %v1010
    %1414 = vmatpush.bf16.msra.mxu0 %v1006
    %1415 = vmatpush.bf16.msra.mxu0 %v1002
    %1416 = vmatpush.bf16.msra.mxu0 %v998
    %1417 = vmatpush.bf16.msra.mxu0 %v994
    %1418 = vmatpush.bf16.msra.mxu0 %v990
    %1419 = vmatpush.bf16.msra.mxu0 %v986
    %1420 = vmatpush.bf16.msra.mxu0 %v982
    %1421 = vmatmul.bf16.gmra.mxu0 %v331
    %v1422 = vpop.f32.mrf.mxu0
    %v1423 = vadd.f32 %v1409, %v1422
    %v1424 = vpop.f32.mrf.mxu0
    %v1425 = vadd.f32 %v1411, %v1424
    %1426 = vdwg.mxu0
    %1427 = vmatpush.bf16.msra.mxu0 %v1042
    %1428 = vmatpush.bf16.msra.mxu0 %v1038
    %1429 = vmatpush.bf16.msra.mxu0 %v1034
    %1430 = vmatpush.bf16.msra.mxu0 %v1030
    %1431 = vmatpush.bf16.msra.mxu0 %v1026
    %1432 = vmatpush.bf16.msra.mxu0 %v1022
    %1433 = vmatpush.bf16.msra.mxu0 %v1018
    %1434 = vmatpush.bf16.msra.mxu0 %v1014
    %1435 = vmatmul.bf16.gmra.mxu0 %v332
    %v1436 = vpop.f32.mrf.mxu0
    %v1437 = vadd.f32 %v1423, %v1436
    %v1438 = vpop.f32.mrf.mxu0
    %v1439 = vadd.f32 %v1425, %v1438
    %1440 = vdwg.mxu0
    %1441 = vmatpush.bf16.msra.mxu0 %v1074
    %1442 = vmatpush.bf16.msra.mxu0 %v1070
    %1443 = vmatpush.bf16.msra.mxu0 %v1066
    %1444 = vmatpush.bf16.msra.mxu0 %v1062
    %1445 = vmatpush.bf16.msra.mxu0 %v1058
    %1446 = vmatpush.bf16.msra.mxu0 %v1054
    %1447 = vmatpush.bf16.msra.mxu0 %v1050
    %1448 = vmatpush.bf16.msra.mxu0 %v1046
    %1449 = vmatmul.bf16.gmra.mxu0 %v333
    %v1450 = vpop.f32.mrf.mxu0
    %v1451 = vadd.f32 %v1437, %v1450
    %v1452 = vpop.f32.mrf.mxu0
    %v1453 = vadd.f32 %v1439, %v1452
    %1454 = vdwg.mxu0
    %1455 = vmatpush.bf16.msra.mxu0 %v1106
    %1456 = vmatpush.bf16.msra.mxu0 %v1102
    %1457 = vmatpush.bf16.msra.mxu0 %v1098
    %1458 = vmatpush.bf16.msra.mxu0 %v1094
    %1459 = vmatpush.bf16.msra.mxu0 %v1090
    %1460 = vmatpush.bf16.msra.mxu0 %v1086
    %1461 = vmatpush.bf16.msra.mxu0 %v1082
    %1462 = vmatpush.bf16.msra.mxu0 %v1078
    %1463 = vmatmul.bf16.gmra.mxu0 %v334
    %v1464 = vpop.f32.mrf.mxu0
    %v1465 = vadd.f32 %v1451, %v1464
    %v1466 = vpop.f32.mrf.mxu0
    %v1467 = vadd.f32 %v1453, %v1466
    %1468 = vdwg.mxu0
    %1469 = vmatpush.bf16.msra.mxu0 %v947
    %1470 = vmatpush.bf16.msra.mxu0 %v943
    %1471 = vmatpush.bf16.msra.mxu0 %v939
    %1472 = vmatpush.bf16.msra.mxu0 %v935
    %1473 = vmatpush.bf16.msra.mxu0 %v931
    %1474 = vmatpush.bf16.msra.mxu0 %v927
    %1475 = vmatpush.bf16.msra.mxu0 %v923
    %1476 = vmatpush.bf16.msra.mxu0 %v919
    %1477 = vmatmul.bf16.gmra.mxu0 %v329
    %v1478 = vpop.f32.mrf.mxu0
    %v1479 = vadd.f32 %v305, %v1478
    %v1480 = vpop.f32.mrf.mxu0
    %v1481 = vadd.f32 %v305, %v1480
    %1482 = vdwg.mxu0
    %1483 = vmatpush.bf16.msra.mxu0 %v979
    %1484 = vmatpush.bf16.msra.mxu0 %v975
    %1485 = vmatpush.bf16.msra.mxu0 %v971
    %1486 = vmatpush.bf16.msra.mxu0 %v967
    %1487 = vmatpush.bf16.msra.mxu0 %v963
    %1488 = vmatpush.bf16.msra.mxu0 %v959
    %1489 = vmatpush.bf16.msra.mxu0 %v955
    %1490 = vmatpush.bf16.msra.mxu0 %v951
    %1491 = vmatmul.bf16.gmra.mxu0 %v330
    %v1492 = vpop.f32.mrf.mxu0
    %v1493 = vadd.f32 %v1479, %v1492
    %v1494 = vpop.f32.mrf.mxu0
    %v1495 = vadd.f32 %v1481, %v1494
    %1496 = vdwg.mxu0
    %1497 = vmatpush.bf16.msra.mxu0 %v1011
    %1498 = vmatpush.bf16.msra.mxu0 %v1007
    %1499 = vmatpush.bf16.msra.mxu0 %v1003
    %1500 = vmatpush.bf16.msra.mxu0 %v999
    %1501 = vmatpush.bf16.msra.mxu0 %v995
    %1502 = vmatpush.bf16.msra.mxu0 %v991
    %1503 = vmatpush.bf16.msra.mxu0 %v987
    %1504 = vmatpush.bf16.msra.mxu0 %v983
    %1505 = vmatmul.bf16.gmra.mxu0 %v331
    %v1506 = vpop.f32.mrf.mxu0
    %v1507 = vadd.f32 %v1493, %v1506
    %v1508 = vpop.f32.mrf.mxu0
    %v1509 = vadd.f32 %v1495, %v1508
    %1510 = vdwg.mxu0
    %1511 = vmatpush.bf16.msra.mxu0 %v1043
    %1512 = vmatpush.bf16.msra.mxu0 %v1039
    %1513 = vmatpush.bf16.msra.mxu0 %v1035
    %1514 = vmatpush.bf16.msra.mxu0 %v1031
    %1515 = vmatpush.bf16.msra.mxu0 %v1027
    %1516 = vmatpush.bf16.msra.mxu0 %v1023
    %1517 = vmatpush.bf16.msra.mxu0 %v1019
    %1518 = vmatpush.bf16.msra.mxu0 %v1015
    %1519 = vmatmul.bf16.gmra.mxu0 %v332
    %v1520 = vpop.f32.mrf.mxu0
    %v1521 = vadd.f32 %v1507, %v1520
    %v1522 = vpop.f32.mrf.mxu0
    %v1523 = vadd.f32 %v1509, %v1522
    %1524 = vdwg.mxu0
    %1525 = vmatpush.bf16.msra.mxu0 %v1075
    %1526 = vmatpush.bf16.msra.mxu0 %v1071
    %1527 = vmatpush.bf16.msra.mxu0 %v1067
    %1528 = vmatpush.bf16.msra.mxu0 %v1063
    %1529 = vmatpush.bf16.msra.mxu0 %v1059
    %1530 = vmatpush.bf16.msra.mxu0 %v1055
    %1531 = vmatpush.bf16.msra.mxu0 %v1051
    %1532 = vmatpush.bf16.msra.mxu0 %v1047
    %1533 = vmatmul.bf16.gmra.mxu0 %v333
    %v1534 = vpop.f32.mrf.mxu0
    %v1535 = vadd.f32 %v1521, %v1534
    %v1536 = vpop.f32.mrf.mxu0
    %v1537 = vadd.f32 %v1523, %v1536
    %1538 = vdwg.mxu0
    %1539 = vmatpush.bf16.msra.mxu0 %v1107
    %1540 = vmatpush.bf16.msra.mxu0 %v1103
    %1541 = vmatpush.bf16.msra.mxu0 %v1099
    %1542 = vmatpush.bf16.msra.mxu0 %v1095
    %1543 = vmatpush.bf16.msra.mxu0 %v1091
    %1544 = vmatpush.bf16.msra.mxu0 %v1087
    %1545 = vmatpush.bf16.msra.mxu0 %v1083
    %1546 = vmatpush.bf16.msra.mxu0 %v1079
    %1547 = vmatmul.bf16.gmra.mxu0 %v334
    %v1548 = vpop.f32.mrf.mxu0
    %v1549 = vadd.f32 %v1535, %v1548
    %v1550 = vpop.f32.mrf.mxu0
    %v1551 = vadd.f32 %v1537, %v1550
    %1552 = vdwg.mxu0
    %1553 = vmatpush.bf16.msra.mxu0 %v948
    %1554 = vmatpush.bf16.msra.mxu0 %v944
    %1555 = vmatpush.bf16.msra.mxu0 %v940
    %1556 = vmatpush.bf16.msra.mxu0 %v936
    %1557 = vmatpush.bf16.msra.mxu0 %v932
    %1558 = vmatpush.bf16.msra.mxu0 %v928
    %1559 = vmatpush.bf16.msra.mxu0 %v924
    %1560 = vmatpush.bf16.msra.mxu0 %v920
    %1561 = vmatmul.bf16.gmra.mxu0 %v329
    %v1562 = vpop.f32.mrf.mxu0
    %v1563 = vadd.f32 %v306, %v1562
    %v1564 = vpop.f32.mrf.mxu0
    %v1565 = vadd.f32 %v306, %v1564
    %1566 = vdwg.mxu0
    %1567 = vmatpush.bf16.msra.mxu0 %v980
    %1568 = vmatpush.bf16.msra.mxu0 %v976
    %1569 = vmatpush.bf16.msra.mxu0 %v972
    %1570 = vmatpush.bf16.msra.mxu0 %v968
    %1571 = vmatpush.bf16.msra.mxu0 %v964
    %1572 = vmatpush.bf16.msra.mxu0 %v960
    %1573 = vmatpush.bf16.msra.mxu0 %v956
    %1574 = vmatpush.bf16.msra.mxu0 %v952
    %1575 = vmatmul.bf16.gmra.mxu0 %v330
    %v1576 = vpop.f32.mrf.mxu0
    %v1577 = vadd.f32 %v1563, %v1576
    %v1578 = vpop.f32.mrf.mxu0
    %v1579 = vadd.f32 %v1565, %v1578
    %1580 = vdwg.mxu0
    %1581 = vmatpush.bf16.msra.mxu0 %v1012
    %1582 = vmatpush.bf16.msra.mxu0 %v1008
    %1583 = vmatpush.bf16.msra.mxu0 %v1004
    %1584 = vmatpush.bf16.msra.mxu0 %v1000
    %1585 = vmatpush.bf16.msra.mxu0 %v996
    %1586 = vmatpush.bf16.msra.mxu0 %v992
    %1587 = vmatpush.bf16.msra.mxu0 %v988
    %1588 = vmatpush.bf16.msra.mxu0 %v984
    %1589 = vmatmul.bf16.gmra.mxu0 %v331
    %v1590 = vpop.f32.mrf.mxu0
    %v1591 = vadd.f32 %v1577, %v1590
    %v1592 = vpop.f32.mrf.mxu0
    %v1593 = vadd.f32 %v1579, %v1592
    %1594 = vdwg.mxu0
    %1595 = vmatpush.bf16.msra.mxu0 %v1044
    %1596 = vmatpush.bf16.msra.mxu0 %v1040
    %1597 = vmatpush.bf16.msra.mxu0 %v1036
    %1598 = vmatpush.bf16.msra.mxu0 %v1032
    %1599 = vmatpush.bf16.msra.mxu0 %v1028
    %1600 = vmatpush.bf16.msra.mxu0 %v1024
    %1601 = vmatpush.bf16.msra.mxu0 %v1020
    %1602 = vmatpush.bf16.msra.mxu0 %v1016
    %1603 = vmatmul.bf16.gmra.mxu0 %v332
    %v1604 = vpop.f32.mrf.mxu0
    %v1605 = vadd.f32 %v1591, %v1604
    %v1606 = vpop.f32.mrf.mxu0
    %v1607 = vadd.f32 %v1593, %v1606
    %1608 = vdwg.mxu0
    %1609 = vmatpush.bf16.msra.mxu0 %v1076
    %1610 = vmatpush.bf16.msra.mxu0 %v1072
    %1611 = vmatpush.bf16.msra.mxu0 %v1068
    %1612 = vmatpush.bf16.msra.mxu0 %v1064
    %1613 = vmatpush.bf16.msra.mxu0 %v1060
    %1614 = vmatpush.bf16.msra.mxu0 %v1056
    %1615 = vmatpush.bf16.msra.mxu0 %v1052
    %1616 = vmatpush.bf16.msra.mxu0 %v1048
    %1617 = vmatmul.bf16.gmra.mxu0 %v333
    %v1618 = vpop.f32.mrf.mxu0
    %v1619 = vadd.f32 %v1605, %v1618
    %v1620 = vpop.f32.mrf.mxu0
    %v1621 = vadd.f32 %v1607, %v1620
    %1622 = vdwg.mxu0
    %1623 = vmatpush.bf16.msra.mxu0 %v1108
    %1624 = vmatpush.bf16.msra.mxu0 %v1104
    %1625 = vmatpush.bf16.msra.mxu0 %v1100
    %1626 = vmatpush.bf16.msra.mxu0 %v1096
    %1627 = vmatpush.bf16.msra.mxu0 %v1092
    %1628 = vmatpush.bf16.msra.mxu0 %v1088
    %1629 = vmatpush.bf16.msra.mxu0 %v1084
    %1630 = vmatpush.bf16.msra.mxu0 %v1080
    %1631 = vmatmul.bf16.gmra.mxu0 %v334
    %v1632 = vpop.f32.mrf.mxu0
    %v1633 = vadd.f32 %v1619, %v1632
    %v1634 = vpop.f32.mrf.mxu0
    %v1635 = vadd.f32 %v1621, %v1634
    %1636 = vdwg.mxu0
    %v1637 = vmax.f32 %v1381, 0.0
    %v1638 = vmax.f32 %v1465, 0.0
    %v1639 = vmax.f32 %v1549, 0.0
    %v1640 = vmax.f32 %v1633, 0.0
    %v1641 = vmax.f32 %v1383, 0.0
    %v1642 = vmax.f32 %v1467, 0.0
    %v1643 = vmax.f32 %v1551, 0.0
    %v1644 = vmax.f32 %v1635, 0.0
    %v1645 = vpack.c.bf16 %v1641, %v1637
    %v1646 = vpack.c.bf16 %v1642, %v1638
    %v1647 = vpack.c.bf16 %v1643, %v1639
    %v1648 = vpack.c.bf16 %v1644, %v1640
    %v1649 = vld [vmem:[#allocation8] sm:$0xff]
    %v1650 = vld [vmem:[#allocation8 + $0x8] sm:$0xff]
    %v1651 = vld [vmem:[#allocation8 + $0x10] sm:$0xff]
    %v1652 = vld [vmem:[#allocation8 + $0x18] sm:$0xff]
    %v1653 = vld [vmem:[#allocation8 + $0x20] sm:$0xff]
    %v1654 = vld [vmem:[#allocation8 + $0x28] sm:$0xff]
    %v1655 = vld [vmem:[#allocation8 + $0x30] sm:$0xff]
    %v1656 = vld [vmem:[#allocation8 + $0x38] sm:$0xff]
    %v1657 = vld [vmem:[#allocation8 + $0x40] sm:$0xff]
    %v1658 = vld [vmem:[#allocation8 + $0x48] sm:$0xff]
    %v1659 = vld [vmem:[#allocation8 + $0x50] sm:$0xff]
    %v1660 = vld [vmem:[#allocation8 + $0x58] sm:$0xff]
    %v1661 = vld [vmem:[#allocation8 + $0x60] sm:$0xff]
    %v1662 = vld [vmem:[#allocation8 + $0x68] sm:$0xff]
    %v1663 = vld [vmem:[#allocation8 + $0x70] sm:$0xff]
    %v1664 = vld [vmem:[#allocation8 + $0x78] sm:$0xff]
    %v1665 = vld [vmem:[#allocation8 + $0x80] sm:$0xff]
    %v1666 = vld [vmem:[#allocation8 + $0x88] sm:$0xff]
    %v1667 = vld [vmem:[#allocation8 + $0x90] sm:$0xff]
    %v1668 = vld [vmem:[#allocation8 + $0x98] sm:$0xff]
    %v1669 = vld [vmem:[#allocation8 + $0xa0] sm:$0xff]
    %v1670 = vld [vmem:[#allocation8 + $0xa8] sm:$0xff]
    %v1671 = vld [vmem:[#allocation8 + $0xb0] sm:$0xff]
    %v1672 = vld [vmem:[#allocation8 + $0xb8] sm:$0xff]
    %v1673 = vld [vmem:[#allocation8 + $0xc0] sm:$0xff]
    %v1674 = vld [vmem:[#allocation8 + $0xc8] sm:$0xff]
    %v1675 = vld [vmem:[#allocation8 + $0xd0] sm:$0xff]
    %v1676 = vld [vmem:[#allocation8 + $0xd8] sm:$0xff]
    %v1677 = vld [vmem:[#allocation8 + $0xe0] sm:$0xff]
    %v1678 = vld [vmem:[#allocation8 + $0xe8] sm:$0xff]
    %v1679 = vld [vmem:[#allocation8 + $0xf0] sm:$0xff]
    %v1680 = vld [vmem:[#allocation8 + $0xf8] sm:$0xff]
    %v1681 = vld [vmem:[#allocation8 + $0x100] sm:$0xff]
    %v1682 = vld [vmem:[#allocation8 + $0x108] sm:$0xff]
    %v1683 = vld [vmem:[#allocation8 + $0x110] sm:$0xff]
    %v1684 = vld [vmem:[#allocation8 + $0x118] sm:$0xff]
    %v1685 = vld [vmem:[#allocation8 + $0x120] sm:$0xff]
    %v1686 = vld [vmem:[#allocation8 + $0x128] sm:$0xff]
    %v1687 = vld [vmem:[#allocation8 + $0x130] sm:$0xff]
    %v1688 = vld [vmem:[#allocation8 + $0x138] sm:$0xff]
    %v1689 = vld [vmem:[#allocation8 + $0x140] sm:$0xff]
    %v1690 = vld [vmem:[#allocation8 + $0x148] sm:$0xff]
    %v1691 = vld [vmem:[#allocation8 + $0x150] sm:$0xff]
    %v1692 = vld [vmem:[#allocation8 + $0x158] sm:$0xff]
    %v1693 = vld [vmem:[#allocation8 + $0x160] sm:$0xff]
    %v1694 = vld [vmem:[#allocation8 + $0x168] sm:$0xff]
    %v1695 = vld [vmem:[#allocation8 + $0x170] sm:$0xff]
    %v1696 = vld [vmem:[#allocation8 + $0x178] sm:$0xff]
    %v1697 = vld [vmem:[#allocation8 + $0x180] sm:$0xff]
    %v1698 = vld [vmem:[#allocation8 + $0x188] sm:$0xff]
    %v1699 = vld [vmem:[#allocation8 + $0x190] sm:$0xff]
    %v1700 = vld [vmem:[#allocation8 + $0x198] sm:$0xff]
    %v1701 = vld [vmem:[#allocation8 + $0x1a0] sm:$0xff]
    %v1702 = vld [vmem:[#allocation8 + $0x1a8] sm:$0xff]
    %v1703 = vld [vmem:[#allocation8 + $0x1b0] sm:$0xff]
    %v1704 = vld [vmem:[#allocation8 + $0x1b8] sm:$0xff]
    %v1705 = vld [vmem:[#allocation8 + $0x1c0] sm:$0xff]
    %v1706 = vld [vmem:[#allocation8 + $0x1c8] sm:$0xff]
    %v1707 = vld [vmem:[#allocation8 + $0x1d0] sm:$0xff]
    %v1708 = vld [vmem:[#allocation8 + $0x1d8] sm:$0xff]
    %v1709 = vld [vmem:[#allocation8 + $0x1e0] sm:$0xff]
    %v1710 = vld [vmem:[#allocation8 + $0x1e8] sm:$0xff]
    %v1711 = vld [vmem:[#allocation8 + $0x1f0] sm:$0xff]
    %v1712 = vld [vmem:[#allocation8 + $0x1f8] sm:$0xff]
    %v1713 = vld [vmem:[%s4] sm:$0x3]
    %v1715 = vperm.slane %v1713, 0
    %v1716 = vperm.slane %v1713, 1
    %v1783 = vunpack.c.l.b16 %v1649
    %v1784 = vunpack.c.h.b16 %v1649
    %v1785 = vunpack.c.l.b16 %v1650
    %v1786 = vunpack.c.h.b16 %v1650
    %v1787 = vunpack.c.l.b16 %v1651
    %v1788 = vunpack.c.h.b16 %v1651
    %v1789 = vunpack.c.l.b16 %v1652
    %v1790 = vunpack.c.h.b16 %v1652
    %v1791 = vunpack.c.l.b16 %v1653
    %v1792 = vunpack.c.h.b16 %v1653
    %v1793 = vunpack.c.l.b16 %v1654
    %v1794 = vunpack.c.h.b16 %v1654
    %v1795 = vunpack.c.l.b16 %v1655
    %v1796 = vunpack.c.h.b16 %v1655
    %v1797 = vunpack.c.l.b16 %v1656
    %v1798 = vunpack.c.h.b16 %v1656
    %v1799 = vunpack.c.l.b16 %v1657
    %v1800 = vunpack.c.h.b16 %v1657
    %v1801 = vunpack.c.l.b16 %v1658
    %v1802 = vunpack.c.h.b16 %v1658
    %v1803 = vunpack.c.l.b16 %v1659
    %v1804 = vunpack.c.h.b16 %v1659
    %v1805 = vunpack.c.l.b16 %v1660
    %v1806 = vunpack.c.h.b16 %v1660
    %v1807 = vunpack.c.l.b16 %v1661
    %v1808 = vunpack.c.h.b16 %v1661
    %v1809 = vunpack.c.l.b16 %v1662
    %v1810 = vunpack.c.h.b16 %v1662
    %v1811 = vunpack.c.l.b16 %v1663
    %v1812 = vunpack.c.h.b16 %v1663
    %v1813 = vunpack.c.l.b16 %v1664
    %v1814 = vunpack.c.h.b16 %v1664
    %v1815 = vunpack.c.l.b16 %v1665
    %v1816 = vunpack.c.h.b16 %v1665
    %v1817 = vunpack.c.l.b16 %v1666
    %v1818 = vunpack.c.h.b16 %v1666
    %v1819 = vunpack.c.l.b16 %v1667
    %v1820 = vunpack.c.h.b16 %v1667
    %v1821 = vunpack.c.l.b16 %v1668
    %v1822 = vunpack.c.h.b16 %v1668
    %v1823 = vunpack.c.l.b16 %v1669
    %v1824 = vunpack.c.h.b16 %v1669
    %v1825 = vunpack.c.l.b16 %v1670
    %v1826 = vunpack.c.h.b16 %v1670
    %v1827 = vunpack.c.l.b16 %v1671
    %v1828 = vunpack.c.h.b16 %v1671
    %v1829 = vunpack.c.l.b16 %v1672
    %v1830 = vunpack.c.h.b16 %v1672
    %v1831 = vunpack.c.l.b16 %v1673
    %v1832 = vunpack.c.h.b16 %v1673
    %v1833 = vunpack.c.l.b16 %v1674
    %v1834 = vunpack.c.h.b16 %v1674
    %v1835 = vunpack.c.l.b16 %v1675
    %v1836 = vunpack.c.h.b16 %v1675
    %v1837 = vunpack.c.l.b16 %v1676
    %v1838 = vunpack.c.h.b16 %v1676
    %v1839 = vunpack.c.l.b16 %v1677
    %v1840 = vunpack.c.h.b16 %v1677
    %v1841 = vunpack.c.l.b16 %v1678
    %v1842 = vunpack.c.h.b16 %v1678
    %v1843 = vunpack.c.l.b16 %v1679
    %v1844 = vunpack.c.h.b16 %v1679
    %v1845 = vunpack.c.l.b16 %v1680
    %v1846 = vunpack.c.h.b16 %v1680
    %v1847 = vunpack.c.l.b16 %v1681
    %v1848 = vunpack.c.h.b16 %v1681
    %v1849 = vunpack.c.l.b16 %v1682
    %v1850 = vunpack.c.h.b16 %v1682
    %v1851 = vunpack.c.l.b16 %v1683
    %v1852 = vunpack.c.h.b16 %v1683
    %v1853 = vunpack.c.l.b16 %v1684
    %v1854 = vunpack.c.h.b16 %v1684
    %v1855 = vunpack.c.l.b16 %v1685
    %v1856 = vunpack.c.h.b16 %v1685
    %v1857 = vunpack.c.l.b16 %v1686
    %v1858 = vunpack.c.h.b16 %v1686
    %v1859 = vunpack.c.l.b16 %v1687
    %v1860 = vunpack.c.h.b16 %v1687
    %v1861 = vunpack.c.l.b16 %v1688
    %v1862 = vunpack.c.h.b16 %v1688
    %v1863 = vunpack.c.l.b16 %v1689
    %v1864 = vunpack.c.h.b16 %v1689
    %v1865 = vunpack.c.l.b16 %v1690
    %v1866 = vunpack.c.h.b16 %v1690
    %v1867 = vunpack.c.l.b16 %v1691
    %v1868 = vunpack.c.h.b16 %v1691
    %v1869 = vunpack.c.l.b16 %v1692
    %v1870 = vunpack.c.h.b16 %v1692
    %v1871 = vunpack.c.l.b16 %v1693
    %v1872 = vunpack.c.h.b16 %v1693
    %v1873 = vunpack.c.l.b16 %v1694
    %v1874 = vunpack.c.h.b16 %v1694
    %v1875 = vunpack.c.l.b16 %v1695
    %v1876 = vunpack.c.h.b16 %v1695
    %v1877 = vunpack.c.l.b16 %v1696
    %v1878 = vunpack.c.h.b16 %v1696
    %v1879 = vunpack.c.l.b16 %v1697
    %v1880 = vunpack.c.h.b16 %v1697
    %v1881 = vunpack.c.l.b16 %v1698
    %v1882 = vunpack.c.h.b16 %v1698
    %v1883 = vunpack.c.l.b16 %v1699
    %v1884 = vunpack.c.h.b16 %v1699
    %v1885 = vunpack.c.l.b16 %v1700
    %v1886 = vunpack.c.h.b16 %v1700
    %v1887 = vunpack.c.l.b16 %v1701
    %v1888 = vunpack.c.h.b16 %v1701
    %v1889 = vunpack.c.l.b16 %v1702
    %v1890 = vunpack.c.h.b16 %v1702
    %v1891 = vunpack.c.l.b16 %v1703
    %v1892 = vunpack.c.h.b16 %v1703
    %v1893 = vunpack.c.l.b16 %v1704
    %v1894 = vunpack.c.h.b16 %v1704
    %v1895 = vunpack.c.l.b16 %v1705
    %v1896 = vunpack.c.h.b16 %v1705
    %v1897 = vunpack.c.l.b16 %v1706
    %v1898 = vunpack.c.h.b16 %v1706
    %v1899 = vunpack.c.l.b16 %v1707
    %v1900 = vunpack.c.h.b16 %v1707
    %v1901 = vunpack.c.l.b16 %v1708
    %v1902 = vunpack.c.h.b16 %v1708
    %v1903 = vunpack.c.l.b16 %v1709
    %v1904 = vunpack.c.h.b16 %v1709
    %v1905 = vunpack.c.l.b16 %v1710
    %v1906 = vunpack.c.h.b16 %v1710
    %v1907 = vunpack.c.l.b16 %v1711
    %v1908 = vunpack.c.h.b16 %v1711
    %v1909 = vunpack.c.l.b16 %v1712
    %v1910 = vunpack.c.h.b16 %v1712
    %v1911 = vpack.c.b16 %v1785, %v1783
    %v1912 = vpack.c.b16 %v1786, %v1784
    %v1913 = vpack.c.b16 %v1789, %v1787
    %v1914 = vpack.c.b16 %v1790, %v1788
    %v1915 = vpack.c.b16 %v1793, %v1791
    %v1916 = vpack.c.b16 %v1794, %v1792
    %v1917 = vpack.c.b16 %v1797, %v1795
    %v1918 = vpack.c.b16 %v1798, %v1796
    %v1919 = vpack.c.b16 %v1801, %v1799
    %v1920 = vpack.c.b16 %v1802, %v1800
    %v1921 = vpack.c.b16 %v1805, %v1803
    %v1922 = vpack.c.b16 %v1806, %v1804
    %v1923 = vpack.c.b16 %v1809, %v1807
    %v1924 = vpack.c.b16 %v1810, %v1808
    %v1925 = vpack.c.b16 %v1813, %v1811
    %v1926 = vpack.c.b16 %v1814, %v1812
    %v1927 = vpack.c.b16 %v1817, %v1815
    %v1928 = vpack.c.b16 %v1818, %v1816
    %v1929 = vpack.c.b16 %v1821, %v1819
    %v1930 = vpack.c.b16 %v1822, %v1820
    %v1931 = vpack.c.b16 %v1825, %v1823
    %v1932 = vpack.c.b16 %v1826, %v1824
    %v1933 = vpack.c.b16 %v1829, %v1827
    %v1934 = vpack.c.b16 %v1830, %v1828
    %v1935 = vpack.c.b16 %v1833, %v1831
    %v1936 = vpack.c.b16 %v1834, %v1832
    %v1937 = vpack.c.b16 %v1837, %v1835
    %v1938 = vpack.c.b16 %v1838, %v1836
    %v1939 = vpack.c.b16 %v1841, %v1839
    %v1940 = vpack.c.b16 %v1842, %v1840
    %v1941 = vpack.c.b16 %v1845, %v1843
    %v1942 = vpack.c.b16 %v1846, %v1844
    %v1943 = vpack.c.b16 %v1849, %v1847
    %v1944 = vpack.c.b16 %v1850, %v1848
    %v1945 = vpack.c.b16 %v1853, %v1851
    %v1946 = vpack.c.b16 %v1854, %v1852
    %v1947 = vpack.c.b16 %v1857, %v1855
    %v1948 = vpack.c.b16 %v1858, %v1856
    %v1949 = vpack.c.b16 %v1861, %v1859
    %v1950 = vpack.c.b16 %v1862, %v1860
    %v1951 = vpack.c.b16 %v1865, %v1863
    %v1952 = vpack.c.b16 %v1866, %v1864
    %v1953 = vpack.c.b16 %v1869, %v1867
    %v1954 = vpack.c.b16 %v1870, %v1868
    %v1955 = vpack.c.b16 %v1873, %v1871
    %v1956 = vpack.c.b16 %v1874, %v1872
    %v1957 = vpack.c.b16 %v1877, %v1875
    %v1958 = vpack.c.b16 %v1878, %v1876
    %v1959 = vpack.c.b16 %v1881, %v1879
    %v1960 = vpack.c.b16 %v1882, %v1880
    %v1961 = vpack.c.b16 %v1885, %v1883
    %v1962 = vpack.c.b16 %v1886, %v1884
    %v1963 = vpack.c.b16 %v1889, %v1887
    %v1964 = vpack.c.b16 %v1890, %v1888
    %v1965 = vpack.c.b16 %v1893, %v1891
    %v1966 = vpack.c.b16 %v1894, %v1892
    %v1967 = vpack.c.b16 %v1897, %v1895
    %v1968 = vpack.c.b16 %v1898, %v1896
    %v1969 = vpack.c.b16 %v1901, %v1899
    %v1970 = vpack.c.b16 %v1902, %v1900
    %v1971 = vpack.c.b16 %v1905, %v1903
    %v1972 = vpack.c.b16 %v1906, %v1904
    %v1973 = vpack.c.b16 %v1909, %v1907
    %v1974 = vpack.c.b16 %v1910, %v1908
    %2039 = vmatpush.bf16.msra.mxu0 %v1925
    %2040 = vmatpush.bf16.msra.mxu0 %v1923
    %2041 = vmatpush.bf16.msra.mxu0 %v1921
    %2042 = vmatpush.bf16.msra.mxu0 %v1919
    %2043 = vmatpush.bf16.msra.mxu0 %v1917
    %2044 = vmatpush.bf16.msra.mxu0 %v1915
    %2045 = vmatpush.bf16.msra.mxu0 %v1913
    %2046 = vmatpush.bf16.msra.mxu0 %v1911
    %2047 = vmatmul.bf16.gmra.mxu0 %v1645
    %v2048 = vpop.f32.mrf.mxu0
    %v2049 = vadd.f32 %v1715, %v2048
    %v2050 = vpop.f32.mrf.mxu0
    %v2051 = vadd.f32 %v1715, %v2050
    %2052 = vdwg.mxu0
    %2053 = vmatpush.bf16.msra.mxu0 %v1941
    %2054 = vmatpush.bf16.msra.mxu0 %v1939
    %2055 = vmatpush.bf16.msra.mxu0 %v1937
    %2056 = vmatpush.bf16.msra.mxu0 %v1935
    %2057 = vmatpush.bf16.msra.mxu0 %v1933
    %2058 = vmatpush.bf16.msra.mxu0 %v1931
    %2059 = vmatpush.bf16.msra.mxu0 %v1929
    %2060 = vmatpush.bf16.msra.mxu0 %v1927
    %2061 = vmatmul.bf16.gmra.mxu0 %v1646
    %v2062 = vpop.f32.mrf.mxu0
    %v2063 = vadd.f32 %v2049, %v2062
    %v2064 = vpop.f32.mrf.mxu0
    %v2065 = vadd.f32 %v2051, %v2064
    %2066 = vdwg.mxu0
    %2067 = vmatpush.bf16.msra.mxu0 %v1957
    %2068 = vmatpush.bf16.msra.mxu0 %v1955
    %2069 = vmatpush.bf16.msra.mxu0 %v1953
    %2070 = vmatpush.bf16.msra.mxu0 %v1951
    %2071 = vmatpush.bf16.msra.mxu0 %v1949
    %2072 = vmatpush.bf16.msra.mxu0 %v1947
    %2073 = vmatpush.bf16.msra.mxu0 %v1945
    %2074 = vmatpush.bf16.msra.mxu0 %v1943
    %2075 = vmatmul.bf16.gmra.mxu0 %v1647
    %v2076 = vpop.f32.mrf.mxu0
    %v2077 = vadd.f32 %v2063, %v2076
    %v2078 = vpop.f32.mrf.mxu0
    %v2079 = vadd.f32 %v2065, %v2078
    %2080 = vdwg.mxu0
    %2081 = vmatpush.bf16.msra.mxu0 %v1973
    %2082 = vmatpush.bf16.msra.mxu0 %v1971
    %2083 = vmatpush.bf16.msra.mxu0 %v1969
    %2084 = vmatpush.bf16.msra.mxu0 %v1967
    %2085 = vmatpush.bf16.msra.mxu0 %v1965
    %2086 = vmatpush.bf16.msra.mxu0 %v1963
    %2087 = vmatpush.bf16.msra.mxu0 %v1961
    %2088 = vmatpush.bf16.msra.mxu0 %v1959
    %2089 = vmatmul.bf16.gmra.mxu0 %v1648
    %v2090 = vpop.f32.mrf.mxu0
    %v2091 = vadd.f32 %v2077, %v2090
    %v2092 = vpop.f32.mrf.mxu0
    %v2093 = vadd.f32 %v2079, %v2092
    %2094 = vdwg.mxu0
    %2095 = vmatpush.bf16.msra.mxu0 %v1926
    %2096 = vmatpush.bf16.msra.mxu0 %v1924
    %2097 = vmatpush.bf16.msra.mxu0 %v1922
    %2098 = vmatpush.bf16.msra.mxu0 %v1920
    %2099 = vmatpush.bf16.msra.mxu0 %v1918
    %2100 = vmatpush.bf16.msra.mxu0 %v1916
    %2101 = vmatpush.bf16.msra.mxu0 %v1914
    %2102 = vmatpush.bf16.msra.mxu0 %v1912
    %2103 = vmatmul.bf16.gmra.mxu0 %v1645
    %v2104 = vpop.f32.mrf.mxu0
    %v2105 = vadd.f32 %v1716, %v2104
    %v2106 = vpop.f32.mrf.mxu0
    %v2107 = vadd.f32 %v1716, %v2106
    %2108 = vdwg.mxu0
    %2109 = vmatpush.bf16.msra.mxu0 %v1942
    %2110 = vmatpush.bf16.msra.mxu0 %v1940
    %2111 = vmatpush.bf16.msra.mxu0 %v1938
    %2112 = vmatpush.bf16.msra.mxu0 %v1936
    %2113 = vmatpush.bf16.msra.mxu0 %v1934
    %2114 = vmatpush.bf16.msra.mxu0 %v1932
    %2115 = vmatpush.bf16.msra.mxu0 %v1930
    %2116 = vmatpush.bf16.msra.mxu0 %v1928
    %2117 = vmatmul.bf16.gmra.mxu0 %v1646
    %v2118 = vpop.f32.mrf.mxu0
    %v2119 = vadd.f32 %v2105, %v2118
    %v2120 = vpop.f32.mrf.mxu0
    %v2121 = vadd.f32 %v2107, %v2120
    %2122 = vdwg.mxu0
    %2123 = vmatpush.bf16.msra.mxu0 %v1958
    %2124 = vmatpush.bf16.msra.mxu0 %v1956
    %2125 = vmatpush.bf16.msra.mxu0 %v1954
    %2126 = vmatpush.bf16.msra.mxu0 %v1952
    %2127 = vmatpush.bf16.msra.mxu0 %v1950
    %2128 = vmatpush.bf16.msra.mxu0 %v1948
    %2129 = vmatpush.bf16.msra.mxu0 %v1946
    %2130 = vmatpush.bf16.msra.mxu0 %v1944
    %2131 = vmatmul.bf16.gmra.mxu0 %v1647
    %v2132 = vpop.f32.mrf.mxu0
    %v2133 = vadd.f32 %v2119, %v2132
    %v2134 = vpop.f32.mrf.mxu0
    %v2135 = vadd.f32 %v2121, %v2134
    %2136 = vdwg.mxu0
    %2137 = vmatpush.bf16.msra.mxu0 %v1974
    %2138 = vmatpush.bf16.msra.mxu0 %v1972
    %2139 = vmatpush.bf16.msra.mxu0 %v1970
    %2140 = vmatpush.bf16.msra.mxu0 %v1968
    %2141 = vmatpush.bf16.msra.mxu0 %v1966
    %2142 = vmatpush.bf16.msra.mxu0 %v1964
    %2143 = vmatpush.bf16.msra.mxu0 %v1962
    %2144 = vmatpush.bf16.msra.mxu0 %v1960
    %2145 = vmatmul.bf16.gmra.mxu0 %v1648
    %v2146 = vpop.f32.mrf.mxu0
    %v2147 = vadd.f32 %v2133, %v2146
    %v2148 = vpop.f32.mrf.mxu0
    %v2149 = vadd.f32 %v2135, %v2148
    %2150 = vdwg.mxu0
    %v2151 = vmax.f32 %v2091, 0.0
    %v2152 = vmax.f32 %v2147, 0.0
    %v2153 = vmax.f32 %v2093, 0.0
    %v2154 = vmax.f32 %v2149, 0.0
    %v2155 = vpack.c.bf16 %v2153, %v2151
    %v2156 = vpack.c.bf16 %v2154, %v2152
    %v2157 = vld [vmem:[#allocation10] sm:$0xf]
    %v2158 = vld [vmem:[#allocation10 + $0x4] sm:$0xf]
    %v2159 = vld [vmem:[#allocation10 + $0x8] sm:$0xf]
    %v2160 = vld [vmem:[#allocation10 + $0xc] sm:$0xf]
    %v2161 = vld [vmem:[#allocation10 + $0x10] sm:$0xf]
    %v2162 = vld [vmem:[#allocation10 + $0x14] sm:$0xf]
    %v2163 = vld [vmem:[#allocation10 + $0x18] sm:$0xf]
    %v2164 = vld [vmem:[#allocation10 + $0x1c] sm:$0xf]
    %v2165 = vld [vmem:[#allocation10 + $0x20] sm:$0xf]
    %v2166 = vld [vmem:[#allocation10 + $0x24] sm:$0xf]
    %v2167 = vld [vmem:[#allocation10 + $0x28] sm:$0xf]
    %v2168 = vld [vmem:[#allocation10 + $0x2c] sm:$0xf]
    %v2169 = vld [vmem:[#allocation10 + $0x30] sm:$0xf]
    %v2170 = vld [vmem:[#allocation10 + $0x34] sm:$0xf]
    %v2171 = vld [vmem:[#allocation10 + $0x38] sm:$0xf]
    %v2172 = vld [vmem:[#allocation10 + $0x3c] sm:$0xf]
    %v2173 = vld [vmem:[#allocation10 + $0x40] sm:$0xf]
    %v2174 = vld [vmem:[#allocation10 + $0x44] sm:$0xf]
    %v2175 = vld [vmem:[#allocation10 + $0x48] sm:$0xf]
    %v2176 = vld [vmem:[#allocation10 + $0x4c] sm:$0xf]
    %v2177 = vld [vmem:[#allocation10 + $0x50] sm:$0xf]
    %v2178 = vld [vmem:[#allocation10 + $0x54] sm:$0xf]
    %v2179 = vld [vmem:[#allocation10 + $0x58] sm:$0xf]
    %v2180 = vld [vmem:[#allocation10 + $0x5c] sm:$0xf]
    %v2181 = vld [vmem:[#allocation10 + $0x60] sm:$0xf]
    %v2182 = vld [vmem:[#allocation10 + $0x64] sm:$0xf]
    %v2183 = vld [vmem:[#allocation10 + $0x68] sm:$0xf]
    %v2184 = vld [vmem:[#allocation10 + $0x6c] sm:$0xf]
    %v2185 = vld [vmem:[#allocation10 + $0x70] sm:$0xf]
    %v2186 = vld [vmem:[#allocation10 + $0x74] sm:$0xf]
    %v2187 = vld [vmem:[#allocation10 + $0x78] sm:$0xf]
    %v2188 = vld [vmem:[#allocation10 + $0x7c] sm:$0xf]
    %v2189 = vld [vmem:[%s6] sm:$0x1]
    %v2191 = vperm.slane %v2189, 0
    %v2225 = vunpack.c.l.b16 %v2157
    %v2226 = vunpack.c.l.b16 %v2158
    %v2227 = vunpack.c.l.b16 %v2159
    %v2228 = vunpack.c.l.b16 %v2160
    %v2229 = vunpack.c.l.b16 %v2161
    %v2230 = vunpack.c.l.b16 %v2162
    %v2231 = vunpack.c.l.b16 %v2163
    %v2232 = vunpack.c.l.b16 %v2164
    %v2233 = vunpack.c.l.b16 %v2165
    %v2234 = vunpack.c.l.b16 %v2166
    %v2235 = vunpack.c.l.b16 %v2167
    %v2236 = vunpack.c.l.b16 %v2168
    %v2237 = vunpack.c.l.b16 %v2169
    %v2238 = vunpack.c.l.b16 %v2170
    %v2239 = vunpack.c.l.b16 %v2171
    %v2240 = vunpack.c.l.b16 %v2172
    %v2241 = vunpack.c.l.b16 %v2173
    %v2242 = vunpack.c.l.b16 %v2174
    %v2243 = vunpack.c.l.b16 %v2175
    %v2244 = vunpack.c.l.b16 %v2176
    %v2245 = vunpack.c.l.b16 %v2177
    %v2246 = vunpack.c.l.b16 %v2178
    %v2247 = vunpack.c.l.b16 %v2179
    %v2248 = vunpack.c.l.b16 %v2180
    %v2249 = vunpack.c.l.b16 %v2181
    %v2250 = vunpack.c.l.b16 %v2182
    %v2251 = vunpack.c.l.b16 %v2183
    %v2252 = vunpack.c.l.b16 %v2184
    %v2253 = vunpack.c.l.b16 %v2185
    %v2254 = vunpack.c.l.b16 %v2186
    %v2255 = vunpack.c.l.b16 %v2187
    %v2256 = vunpack.c.l.b16 %v2188
    %v2257 = vpack.c.b16 %v2226, %v2225
    %v2258 = vpack.c.b16 %v2228, %v2227
    %v2259 = vpack.c.b16 %v2230, %v2229
    %v2260 = vpack.c.b16 %v2232, %v2231
    %v2261 = vpack.c.b16 %v2234, %v2233
    %v2262 = vpack.c.b16 %v2236, %v2235
    %v2263 = vpack.c.b16 %v2238, %v2237
    %v2264 = vpack.c.b16 %v2240, %v2239
    %v2265 = vpack.c.b16 %v2242, %v2241
    %v2266 = vpack.c.b16 %v2244, %v2243
    %v2267 = vpack.c.b16 %v2246, %v2245
    %v2268 = vpack.c.b16 %v2248, %v2247
    %v2269 = vpack.c.b16 %v2250, %v2249
    %v2270 = vpack.c.b16 %v2252, %v2251
    %v2271 = vpack.c.b16 %v2254, %v2253
    %v2272 = vpack.c.b16 %v2256, %v2255
    %2289 = vmatpush.bf16.msra.mxu0 %v2264
    %2290 = vmatpush.bf16.msra.mxu0 %v2263
    %2291 = vmatpush.bf16.msra.mxu0 %v2262
    %2292 = vmatpush.bf16.msra.mxu0 %v2261
    %2293 = vmatpush.bf16.msra.mxu0 %v2260
    %2294 = vmatpush.bf16.msra.mxu0 %v2259
    %2295 = vmatpush.bf16.msra.mxu0 %v2258
    %2296 = vmatpush.bf16.msra.mxu0 %v2257
    %2297 = vmatmul.bf16.gmra.mxu0 %v2155
    %v2298 = vpop.f32.mrf.mxu0
    %v2299 = vadd.f32 %v2191, %v2298
    %v2300 = vpop.f32.mrf.mxu0
    %v2301 = vadd.f32 %v2191, %v2300
    %2302 = vdwg.mxu0
    %2303 = vmatpush.bf16.msra.mxu0 %v2272
    %2304 = vmatpush.bf16.msra.mxu0 %v2271
    %2305 = vmatpush.bf16.msra.mxu0 %v2270
    %2306 = vmatpush.bf16.msra.mxu0 %v2269
    %2307 = vmatpush.bf16.msra.mxu0 %v2268
    %2308 = vmatpush.bf16.msra.mxu0 %v2267
    %2309 = vmatpush.bf16.msra.mxu0 %v2266
    %2310 = vmatpush.bf16.msra.mxu0 %v2265
    %2311 = vmatmul.bf16.gmra.mxu0 %v2156
    %v2312 = vpop.f32.mrf.mxu0
    %v2313 = vadd.f32 %v2299, %v2312
    %v2314 = vpop.f32.mrf.mxu0
    %v2315 = vadd.f32 %v2301, %v2314
    %2316 = vdwg.mxu0
    %2317 = vst [vmem:[#allocation11] sm:$0xff] %v2313
    %2318 = vst [vmem:[#allocation11 + $0x8] sm:$0xff] %v2315
    // Predicated region
    $region50: #{tpu_custom_call.1} parent=1 // pred_check
      _
    $region51: #{tpu_custom_call.1} parent=1 // pred_check_branch
      %2320 = sbr.rel (0) target = $region53
    $region52: #{tpu_custom_call.1} parent=1 // pred_region
      %2322 = vsyncadd [#allocation4], 0
      %s2323 = sshll.u32 [#allocation11], 4
      %s2324 = int_to_ptr.vmem [resolvable:$true] %s2323
      %s2325 = sshll.u32 %s7, 4
      %s2326 = int_to_ptr.hbm [resolvable:$true] %s2325
      %2331 = dma.vmem_to_hbm [thread:$0]  %s2324, 256, %s2326, [#allocation4], 128, 128, 8
    $region53: #{tpu_custom_call.1} parent=1 // pred_fallthru
      _
    // Predicated region
    $region54: #{tpu_custom_call.1} parent=1 // pred_check
      _
    $region55: #{tpu_custom_call.1} parent=1 // pred_check_branch
      %2333 = sbr.rel (0) target = $region57
    $region56: #{tpu_custom_call.1} parent=1 // pred_region
      %2335 = dma.done [#allocation4], 256
    $region57: #{tpu_custom_call.1} parent=1 // pred_fallthru
      _
    %2336 = vsyncpa [#allocation3], 1
    %2337 = vsyncpa [#allocation6], 1
    %2338 = vsyncpa [#allocation9], 1
    %2339 = vsyncpa [#allocation4], 1

</llo_original>
